<compile_context>
chip_gen: v5e
topology: v5e:2x2
jax: 0.10.0
libtpu: 0.0.40
codegen_flags: <defaults>
</compile_context>

<pallas_src>
import functools

import jax
import jax.numpy as jnp
from jax.experimental import pallas as pl
from jax.experimental.pallas import tpu as pltpu


def _cinema_fused_kernel(sc_ref, x_ref, cmat_ref, cbias_ref, warm_ref,
                         w1_ref, t1_ref, w2_ref, t2_ref, w3_ref, b3_ref,
                         o_ref, buf1, buf2, *, W, G):
    N = x_ref.shape[1]                      # H*W, spatial flattened on lanes
    L = buf1.shape[1]                       # 2*G + N

    shadows = sc_ref[0]
    inv_mids = sc_ref[1]
    highlights = sc_ref[2]
    inv_contrast = sc_ref[3]
    saturation = sc_ref[4]
    strength = sc_ref[5]

    # ---- zero guard lanes of the activation slabs (every step; scratch is
    # per-core on v7x megacore, so no program_id-based one-shot init). ----
    # Left region [0, G+1) and right region [G+N-1, L): the extra interior
    # lanes (G and G+N-1) and the guard lanes touched by the shifted stores
    # are overwritten with correct values below.
    ZW = G + 1
    buf1[:, 0:ZW] = jnp.zeros((buf1.shape[0], ZW), jnp.bfloat16)
    buf1[:, G + N - 1:L] = jnp.zeros((buf1.shape[0], ZW), jnp.bfloat16)
    buf2[:, 0:ZW] = jnp.zeros((buf2.shape[0], ZW), jnp.bfloat16)
    buf2[:, G + N - 1:L] = jnp.zeros((buf2.shape[0], ZW), jnp.bfloat16)

    xo = x_ref[...]                         # (3, N) f32 original image

    # ---- classical stage: color matrix + bias (per-pixel) ----
    cm = cmat_ref[...]                      # (3, 3), already clamped
    x1 = (cm[:, 0:1] * xo[0:1] + cm[:, 1:2] * xo[1:2] + cm[:, 2:3] * xo[2:3]
          + cbias_ref[...])                 # (3, N)

    def _pow(v, e):                         # v clamped > 0 so exp(e*log(v)) == v**e
        return jnp.exp(e * jnp.log(jnp.clip(v, 1e-7, 1.0)))

    # tone curve
    sm = jnp.clip(1.0 - x1, 0.0, 1.0)
    x1 = x1 + shadows * (sm * sm) * (1.0 - x1)
    xm = _pow(x1, inv_mids)
    hm = jnp.clip(xm, 0.0, 1.0)
    x1 = jnp.clip(xm * (1.0 - (hm * hm) * (1.0 - highlights)), 0.0, 1.0)

    # grading: contrast, saturation, warmth
    xc = _pow(x1, inv_contrast)
    luma = 0.299 * xc[0:1] + 0.587 * xc[1:2] + 0.114 * xc[2:3]
    xs = luma + saturation * (xc - luma)
    xcl = jnp.clip(xs * warm_ref[...], 0.0, 1.0)   # (3, N) classical == blended

    # Park the classical result in the VMEM-resident output block; it is
    # re-read for the final blend (shortens f32 live range across the convs).
    o_ref[...] = xcl

    # ---- ML enhancement ----
    # Row-wrap masks, applied once on the inputs (not per-tap on outputs).
    col = jax.lax.broadcasted_iota(jnp.int32, (1, N), 1) % W
    not_left = col != 0
    not_right = col != (W - 1)
    zb = jnp.zeros((), jnp.bfloat16)

    def store_shifted(buf, val_f32, cin):
        # dx-stacked slab: block d (rows [d*cin,(d+1)*cin)) holds the input
        # shifted by dw = d-1, stored at lane offset -(d-1) so that slab lane
        # G+m of block d equals input[m + d - 1] with the row-wrap mask baked
        # in.  Edge lanes not covered by a store were pre-zeroed above.
        vb = val_f32.astype(jnp.bfloat16)
        buf[0 * cin:1 * cin, G + 1:G + 1 + N] = jnp.where(not_right, vb, zb)
        buf[1 * cin:2 * cin, G:G + N] = vb
        buf[2 * cin:3 * cin, G - 1:G - 1 + N] = jnp.where(not_left, vb, zb)

    def conv3x3(buf, w_ref):
        # 3 lane-offset dots of (Cout, 3*Cin) x (3*Cin, N), f32 accumulation.
        acc = jnp.dot(w_ref[0], buf[:, G - W:G - W + N],
                      preferred_element_type=jnp.float32)
        acc = acc + jnp.dot(w_ref[1], buf[:, G:G + N],
                            preferred_element_type=jnp.float32)
        acc = acc + jnp.dot(w_ref[2], buf[:, G + W:G + W + N],
                            preferred_element_type=jnp.float32)
        return acc

    # conv1 input: channels 0..2 = original, 3..5 = classical.
    x6 = jnp.concatenate([xo, xcl], axis=0)            # (6, N)
    store_shifted(buf1, x6, 6)

    # conv1 (6 -> 32), BN scale folded into weights, shift + ReLU here.
    f1 = jnp.maximum(conv3x3(buf1, w1_ref) + t1_ref[...], 0.0)
    store_shifted(buf2, f1, 32)

    # conv2 (32 -> 32), folded BN scale, shift + ReLU.  buf2 reused in place.
    f2 = jnp.maximum(conv3x3(buf2, w2_ref) + t2_ref[...], 0.0)
    store_shifted(buf2, f2, 32)

    # conv3 (32 -> 3) + tanh residual, blend with classical, clamp.
    res = jnp.tanh(conv3x3(buf2, w3_ref) + b3_ref[...])
    o_ref[...] = jnp.clip(o_ref[...] + strength * res, 0.0, 1.0)


def _group_conv_weights(w_hwio, scale=None):
    # (kh, kw, cin, cout) -> (kh, cout, kw*cin) bf16, BN scale folded in.
    if scale is not None:
        w_hwio = w_hwio * scale.reshape(1, 1, 1, -1)
    kh, kw, cin, cout = w_hwio.shape
    wg = jnp.transpose(w_hwio, (0, 3, 1, 2)).reshape(kh, cout, kw * cin)
    return wg.astype(jnp.bfloat16)


def cinema_forward(x_nchw, params):
    B, C, H, W = x_nchw.shape
    assert C == 3
    N = H * W
    G = ((W + 127) // 128) * 128                      # guard >= W, lane aligned, >= 128
    L = 2 * G + N

    sc = params["scalars"]                            # (7,)
    warmth = sc[5]
    kern_sc = jnp.stack([sc[0], sc[1], sc[2], sc[3], sc[4], sc[6]]).astype(jnp.float32)
    warm_vec = jnp.stack([1.0 + warmth, 1.0 + 0.5 * warmth,
                          1.0 - 0.7 * warmth]).reshape(3, 1).astype(jnp.float32)
    cmat = params["cmat"].astype(jnp.float32)
    cbias = params["cbias"].reshape(3, 1).astype(jnp.float32)

    # Grouped bf16 conv weights with BN scale folded in (host side, free).
    wg1 = _group_conv_weights(params["w1"], params["s1"])   # (3, 32, 18)
    wg2 = _group_conv_weights(params["w2"], params["s2"])   # (3, 32, 96)
    wg3 = _group_conv_weights(params["w3"])                  # (3, 3, 96)
    t1 = params["t1"].reshape(32, 1).astype(jnp.float32)
    t2 = params["t2"].reshape(32, 1).astype(jnp.float32)
    b3 = params["b3"].reshape(3, 1).astype(jnp.float32)

    x_flat = x_nchw.reshape(B, 3, N)                  # free reshape (NCHW kept)

    # Explicit VMEM budget: slabs + double-buffered in/out blocks + headroom
    # for f32/bf16 intermediates.  Clamp to device capacity with margin.
    vmem_needed = ((18 + 96) * L * 2            # bf16 activation slabs
                   + 4 * 3 * N * 4              # double-buffered in/out blocks
                   + 288 * N                    # intermediates headroom
                   + (4 << 20))                 # fixed slack (weights, etc.)
    try:
        cap = int(pltpu.get_tpu_info().vmem_capacity_bytes)
    except Exception:
        cap = 64 << 20
    vmem_limit = int(min(max(vmem_needed, 32 << 20), int(cap * 0.9)))

    kernel = functools.partial(_cinema_fused_kernel, W=W, G=G)
    out = pl.pallas_call(
        kernel,
        out_shape=jax.ShapeDtypeStruct((B, 3, N), jnp.float32),
        grid_spec=pltpu.PrefetchScalarGridSpec(
            num_scalar_prefetch=0,
            grid=(B,),
            in_specs=[
                pl.BlockSpec(memory_space=pltpu.MemorySpace.SMEM),     # scalars (6,)
                pl.BlockSpec((None, 3, N), lambda b: (b, 0, 0)),       # x (flat)
                pl.BlockSpec((3, 3), lambda b: (0, 0)),                # color matrix
                pl.BlockSpec((3, 1), lambda b: (0, 0)),                # color bias
                pl.BlockSpec((3, 1), lambda b: (0, 0)),                # warmth factors
                pl.BlockSpec((3, 32, 18), lambda b: (0, 0, 0)),        # w1 grouped bf16
                pl.BlockSpec((32, 1), lambda b: (0, 0)),               # bn1 shift
                pl.BlockSpec((3, 32, 96), lambda b: (0, 0, 0)),        # w2 grouped bf16
                pl.BlockSpec((32, 1), lambda b: (0, 0)),               # bn2 shift
                pl.BlockSpec((3, 3, 96), lambda b: (0, 0, 0)),         # w3 grouped bf16
                pl.BlockSpec((3, 1), lambda b: (0, 0)),                # conv3 bias
            ],
            out_specs=pl.BlockSpec((None, 3, N), lambda b: (b, 0, 0)),
            scratch_shapes=[
                pltpu.VMEM((18, L), jnp.bfloat16),    # dx-stacked conv1 input slab
                pltpu.VMEM((96, L), jnp.bfloat16),    # dx-stacked feature slab (reused)
            ],
        ),
        compiler_params=pltpu.CompilerParams(
            dimension_semantics=("parallel",),
            vmem_limit_bytes=vmem_limit,
        ),
    )(kern_sc, x_flat, cmat, cbias, warm_vec,
      wg1, t1, wg2, t2, wg3, b3)
    return out.reshape(B, 3, H, W)


# ----------------------------------------------------------------------------
# Parameter setup (deterministic, synthetic; clamps applied as in forward())
# ----------------------------------------------------------------------------
def init_params(key):
    ks = jax.random.split(key, 14)

    cmat = jnp.clip(jnp.eye(3, dtype=jnp.float32), 0.8, 1.2)   # off-diag 0 -> 0.8
    cbias = jnp.clip(jnp.zeros((3,), jnp.float32), -0.05, 0.05)
    shadows = jnp.clip(jnp.float32(0.05), -0.1, 0.2)
    mids = jnp.clip(jnp.float32(1.0), 0.85, 1.15)
    highlights = jnp.clip(jnp.float32(0.95), 0.85, 1.15)
    contrast = jnp.clip(jnp.float32(1.05), 0.9, 1.2)
    saturation = jnp.clip(jnp.float32(1.2), 0.8, 1.5)
    warmth = jnp.clip(jnp.float32(0.02), -0.05, 0.1)
    strength = jnp.clip(jnp.float32(0.2), 0.05, 0.4)
    scalars = jnp.stack([shadows, 1.0 / mids, highlights, 1.0 / contrast,
                         saturation, warmth, strength]).astype(jnp.float32)

    def conv_w(k, kh, kw, cin, cout):
        return (0.1 * jax.random.normal(k, (kh, kw, cin, cout))).astype(jnp.float32)

    w1 = conv_w(ks[0], 3, 3, 6, 32)
    b1 = (0.05 * jax.random.normal(ks[1], (32,))).astype(jnp.float32)
    w2 = conv_w(ks[2], 3, 3, 32, 32)
    b2 = (0.05 * jax.random.normal(ks[3], (32,))).astype(jnp.float32)
    w3 = conv_w(ks[4], 3, 3, 32, 3)
    b3 = (0.02 * jax.random.normal(ks[5], (3,))).astype(jnp.float32)

    def bn_fold(kg, kb, km, kv, conv_bias, c):
        gamma = 1.0 + 0.1 * jax.random.normal(kg, (c,))
        beta = 0.05 * jax.random.normal(kb, (c,))
        mean = 0.02 * jax.random.normal(km, (c,))
        var = 0.9 + 0.2 * jax.random.uniform(kv, (c,))
        eps = 1e-5
        scale = gamma / jnp.sqrt(var + eps)
        shift = scale * (conv_bias - mean) + beta
        return scale.astype(jnp.float32), shift.astype(jnp.float32)

    s1, t1 = bn_fold(ks[6], ks[7], ks[8], ks[9], b1, 32)
    s2, t2 = bn_fold(ks[10], ks[11], ks[12], ks[13], b2, 32)

    return dict(scalars=scalars, cmat=cmat, cbias=cbias,
                w1=w1, s1=s1, t1=t1, w2=w2, s2=s2, t2=t2, w3=w3, b3=b3)


# ----------------------------------------------------------------------------
# Pure-JAX reference (numerical sanity check; unfolded BN, f32 convs)
# ----------------------------------------------------------------------------
def reference_forward(x_nchw, params):
    B, C, H, W = x_nchw.shape
    sc = params["scalars"]
    shadows, inv_mids, highlights = sc[0], sc[1], sc[2]
    inv_contrast, sat, warm, strength = sc[3], sc[4], sc[5], sc[6]

    xf = x_nchw.reshape(B, 3, -1)
    x1 = jnp.einsum('ij,bjn->bin', params["cmat"], xf) + params["cbias"].reshape(1, 3, 1)

    sm = jnp.clip(1 - x1, 0, 1) ** 2
    x1 = x1 + shadows * sm * (1 - x1)
    xm = jnp.exp(inv_mids * jnp.log(jnp.clip(x1, 1e-7, 1)))
    hm = jnp.clip(xm, 0, 1) ** 2
    x1 = jnp.clip(xm * (1 - hm * (1 - highlights)), 0, 1)

    xc = jnp.exp(inv_contrast * jnp.log(jnp.clip(x1, 1e-7, 1)))
    luma = 0.299 * xc[:, 0:1] + 0.587 * xc[:, 1:2] + 0.114 * xc[:, 2:3]
    xs = luma + sat * (xc - luma)
    r = jnp.clip(xs[:, 0:1] * (1 + warm), 0, 1)
    g = jnp.clip(xs[:, 1:2] * (1 + 0.5 * warm), 0, 1)
    b = jnp.clip(xs[:, 2:3] * (1 - 0.7 * warm), 0, 1)
    xcl = jnp.concatenate([r, g, b], axis=1).reshape(B, 3, H, W)

    xo = x_nchw.transpose(0, 2, 3, 1)
    xb = xcl.transpose(0, 2, 3, 1)
    h = jnp.concatenate([xo, xb], axis=-1)

    def conv(inp, w):
        return jax.lax.conv_general_dilated(
            inp, w, (1, 1), 'SAME',
            dimension_numbers=('NHWC', 'HWIO', 'NHWC'),
            precision=jax.lax.Precision.HIGHEST)

    h1 = jnp.maximum(conv(h, params["w1"]) * params["s1"] + params["t1"], 0)
    h2 = jnp.maximum(conv(h1, params["w2"]) * params["s2"] + params["t2"], 0)
    res = jnp.tanh(conv(h2, params["w3"]) + params["b3"])
    out = jnp.clip(xb + strength * res, 0, 1)
    return out.transpose(0, 3, 1, 2)


if __name__ == "__main__":
    key = jax.random.PRNGKey(0)
    kx, kp = jax.random.split(key)
    params = init_params(kp)

    # Small canonical shape + a second shape with W > 128 (non-multiple of 128)
    # to exercise lane-misaligned dh-offset slices and masked stores.
    for shape in [(2, 3, 16, 16), (1, 3, 24, 136)]:
        x = jax.random.uniform(kx, shape, dtype=jnp.float32)   # NCHW in [0,1]
        out = jax.block_until_ready(cinema_forward(x, params))
        assert out.shape == shape
        ref = jax.block_until_ready(reference_forward(x, params))
        err = float(jnp.max(jnp.abs(out - ref)))
        assert err < 5e-2, f"mismatch vs reference for {shape}: {err}"

    print("KERNEL_OK")
</pallas_src>

<mosaic_0001>
module attributes {stable_mosaic.version = 11 : i64} {
  func.func @_cinema_fused_kernel(%arg0: i32, %arg1: memref<6xf32, #tpu.memory_space<smem>>, %arg2: memref<1x3x256xf32, #tpu.memory_space<vmem>>, %arg3: memref<3x3xf32, #tpu.memory_space<vmem>>, %arg4: memref<3x1xf32, #tpu.memory_space<vmem>>, %arg5: memref<3x1xf32, #tpu.memory_space<vmem>>, %arg6: memref<3x32x18xbf16, #tpu.memory_space<vmem>>, %arg7: memref<32x1xf32, #tpu.memory_space<vmem>>, %arg8: memref<3x32x96xbf16, #tpu.memory_space<vmem>>, %arg9: memref<32x1xf32, #tpu.memory_space<vmem>>, %arg10: memref<3x3x96xbf16, #tpu.memory_space<vmem>>, %arg11: memref<3x1xf32, #tpu.memory_space<vmem>>, %arg12: memref<1x3x256xf32, #tpu.memory_space<vmem>>, %arg13: memref<18x512xbf16, #tpu.memory_space<vmem>>, %arg14: memref<96x512xbf16, #tpu.memory_space<vmem>>) attributes {dimension_semantics = [#tpu.dimension_semantics<parallel>], iteration_bounds = array<i64: 2>, scalar_prefetch = 0 : i64, scratch_operands = 2 : i64, tpu.core_type = #tpu.core_type<tc>, window_params = [{transform_indices = @transform_0, window_bounds = array<i64: 6>}, {transform_indices = @transform_1, window_bounds = array<i64: 1, 3, 256>}, {pipeline_mode = #tpu.pipeline_mode<synchronous>, transform_indices = @transform_2, window_bounds = array<i64: 3, 3>}, {pipeline_mode = #tpu.pipeline_mode<synchronous>, transform_indices = @transform_3, window_bounds = array<i64: 3, 1>}, {pipeline_mode = #tpu.pipeline_mode<synchronous>, transform_indices = @transform_4, window_bounds = array<i64: 3, 1>}, {pipeline_mode = #tpu.pipeline_mode<synchronous>, transform_indices = @transform_5, window_bounds = array<i64: 3, 32, 18>}, {pipeline_mode = #tpu.pipeline_mode<synchronous>, transform_indices = @transform_6, window_bounds = array<i64: 32, 1>}, {pipeline_mode = #tpu.pipeline_mode<synchronous>, transform_indices = @transform_7, window_bounds = array<i64: 3, 32, 96>}, {pipeline_mode = #tpu.pipeline_mode<synchronous>, transform_indices = @transform_8, window_bounds = array<i64: 32, 1>}, {pipeline_mode = #tpu.pipeline_mode<synchronous>, transform_indices = @transform_9, window_bounds = array<i64: 3, 3, 96>}, {pipeline_mode = #tpu.pipeline_mode<synchronous>, transform_indices = @transform_10, window_bounds = array<i64: 3, 1>}, {transform_indices = @transform_11, window_bounds = array<i64: 1, 3, 256>}]} {
    %c0 = arith.constant 0 : index
    %0 = memref.load %arg1[%c0] : memref<6xf32, #tpu.memory_space<smem>>
    %c1 = arith.constant 1 : index
    %1 = memref.load %arg1[%c1] : memref<6xf32, #tpu.memory_space<smem>>
    %c2 = arith.constant 2 : index
    %2 = memref.load %arg1[%c2] : memref<6xf32, #tpu.memory_space<smem>>
    %c3 = arith.constant 3 : index
    %3 = memref.load %arg1[%c3] : memref<6xf32, #tpu.memory_space<smem>>
    %c4 = arith.constant 4 : index
    %4 = memref.load %arg1[%c4] : memref<6xf32, #tpu.memory_space<smem>>
    %c5 = arith.constant 5 : index
    %5 = memref.load %arg1[%c5] : memref<6xf32, #tpu.memory_space<smem>>
    %cst = arith.constant 0.000000e+00 : bf16
    %6 = vector.broadcast %cst : bf16 to vector<18x129xbf16>
    %c0_0 = arith.constant 0 : index
    %c0_1 = arith.constant 0 : index
    %7 = vector.load %arg13[%c0_0, %c0_1] : memref<18x512xbf16, #tpu.memory_space<vmem>>, vector<18x129xbf16>
    tpu.vector_store %arg13[%c0_0, %c0_1], %6 {strides = array<i32>} : memref<18x512xbf16, #tpu.memory_space<vmem>>, vector<18x129xbf16>,
    %cst_2 = arith.constant 0.000000e+00 : bf16
    %8 = vector.broadcast %cst_2 : bf16 to vector<18x129xbf16>
    %c0_3 = arith.constant 0 : index
    %c383 = arith.constant 383 : index
    %9 = vector.load %arg13[%c0_3, %c383] : memref<18x512xbf16, #tpu.memory_space<vmem>>, vector<18x129xbf16>
    tpu.vector_store %arg13[%c0_3, %c383], %8 {strides = array<i32>} : memref<18x512xbf16, #tpu.memory_space<vmem>>, vector<18x129xbf16>,
    %cst_4 = arith.constant 0.000000e+00 : bf16
    %10 = vector.broadcast %cst_4 : bf16 to vector<96x129xbf16>
    %c0_5 = arith.constant 0 : index
    %c0_6 = arith.constant 0 : index
    %11 = vector.load %arg14[%c0_5, %c0_6] : memref<96x512xbf16, #tpu.memory_space<vmem>>, vector<96x129xbf16>
    tpu.vector_store %arg14[%c0_5, %c0_6], %10 {strides = array<i32>} : memref<96x512xbf16, #tpu.memory_space<vmem>>, vector<96x129xbf16>,
    %cst_7 = arith.constant 0.000000e+00 : bf16
    %12 = vector.broadcast %cst_7 : bf16 to vector<96x129xbf16>
    %c0_8 = arith.constant 0 : index
    %c383_9 = arith.constant 383 : index
    %13 = vector.load %arg14[%c0_8, %c383_9] : memref<96x512xbf16, #tpu.memory_space<vmem>>, vector<96x129xbf16>
    tpu.vector_store %arg14[%c0_8, %c383_9], %12 {strides = array<i32>} : memref<96x512xbf16, #tpu.memory_space<vmem>>, vector<96x129xbf16>,
    %c0_10 = arith.constant 0 : index
    %c0_11 = arith.constant 0 : index
    %c0_12 = arith.constant 0 : index
    %14 = vector.load %arg2[%c0_10, %c0_11, %c0_12] : memref<1x3x256xf32, #tpu.memory_space<vmem>>, vector<1x3x256xf32>
    %15 = vector.shape_cast %14 : vector<1x3x256xf32> to vector<3x256xf32>
    %c0_13 = arith.constant 0 : index
    %c0_14 = arith.constant 0 : index
    %16 = vector.load %arg3[%c0_13, %c0_14] : memref<3x3xf32, #tpu.memory_space<vmem>>, vector<3x3xf32>
    %17 = vector.extract_strided_slice %16 {offsets = [0, 0], sizes = [3, 1], strides = [1, 1]} : vector<3x3xf32> to vector<3x1xf32>
    %18 = vector.extract_strided_slice %15 {offsets = [0, 0], sizes = [1, 256], strides = [1, 1]} : vector<3x256xf32> to vector<1x256xf32>
    %19 = vector.broadcast %17 : vector<3x1xf32> to vector<3x256xf32>
    %20 = vector.broadcast %18 : vector<1x256xf32> to vector<3x256xf32>
    %21 = arith.mulf %19, %20 : vector<3x256xf32>
    %22 = vector.extract_strided_slice %16 {offsets = [0, 1], sizes = [3, 1], strides = [1, 1]} : vector<3x3xf32> to vector<3x1xf32>
    %23 = vector.extract_strided_slice %15 {offsets = [1, 0], sizes = [1, 256], strides = [1, 1]} : vector<3x256xf32> to vector<1x256xf32>
    %24 = vector.broadcast %22 : vector<3x1xf32> to vector<3x256xf32>
    %25 = vector.broadcast %23 : vector<1x256xf32> to vector<3x256xf32>
    %26 = arith.mulf %24, %25 : vector<3x256xf32>
    %27 = arith.addf %21, %26 : vector<3x256xf32>
    %28 = vector.extract_strided_slice %16 {offsets = [0, 2], sizes = [3, 1], strides = [1, 1]} : vector<3x3xf32> to vector<3x1xf32>
    %29 = vector.extract_strided_slice %15 {offsets = [2, 0], sizes = [1, 256], strides = [1, 1]} : vector<3x256xf32> to vector<1x256xf32>
    %30 = vector.broadcast %28 : vector<3x1xf32> to vector<3x256xf32>
    %31 = vector.broadcast %29 : vector<1x256xf32> to vector<3x256xf32>
    %32 = arith.mulf %30, %31 : vector<3x256xf32>
    %33 = arith.addf %27, %32 : vector<3x256xf32>
    %c0_15 = arith.constant 0 : index
    %c0_16 = arith.constant 0 : index
    %34 = vector.load %arg4[%c0_15, %c0_16] : memref<3x1xf32, #tpu.memory_space<vmem>>, vector<3x1xf32>
    %35 = vector.broadcast %34 : vector<3x1xf32> to vector<3x256xf32>
    %36 = arith.addf %33, %35 : vector<3x256xf32>
    %cst_17 = arith.constant 1.000000e+00 : f32
    %37 = vector.broadcast %cst_17 : f32 to vector<3x256xf32>
    %38 = arith.subf %37, %36 : vector<3x256xf32>
    %cst_18 = arith.constant 0.000000e+00 : f32
    %cst_19 = arith.constant 1.000000e+00 : f32
    %39 = vector.broadcast %cst_18 : f32 to vector<3x256xf32>
    %40 = arith.maximumf %39, %38 : vector<3x256xf32>
    %41 = vector.broadcast %cst_19 : f32 to vector<3x256xf32>
    %42 = arith.minimumf %41, %40 : vector<3x256xf32>
    %43 = arith.mulf %42, %42 : vector<3x256xf32>
    %44 = vector.broadcast %0 : f32 to vector<3x256xf32>
    %45 = arith.mulf %44, %43 : vector<3x256xf32>
    %cst_20 = arith.constant 1.000000e+00 : f32
    %46 = vector.broadcast %cst_20 : f32 to vector<3x256xf32>
    %47 = arith.subf %46, %36 : vector<3x256xf32>
    %48 = arith.mulf %45, %47 : vector<3x256xf32>
    %49 = arith.addf %36, %48 : vector<3x256xf32>
    %cst_21 = arith.constant 1.000000e-07 : f32
    %cst_22 = arith.constant 1.000000e+00 : f32
    %50 = vector.broadcast %cst_21 : f32 to vector<3x256xf32>
    %51 = arith.maximumf %50, %49 : vector<3x256xf32>
    %52 = vector.broadcast %cst_22 : f32 to vector<3x256xf32>
    %53 = arith.minimumf %52, %51 : vector<3x256xf32>
    %54 = math.log %53 : vector<3x256xf32>
    %55 = vector.broadcast %1 : f32 to vector<3x256xf32>
    %56 = arith.mulf %55, %54 : vector<3x256xf32>
    %57 = math.exp %56 : vector<3x256xf32>
    %cst_23 = arith.constant 0.000000e+00 : f32
    %cst_24 = arith.constant 1.000000e+00 : f32
    %58 = vector.broadcast %cst_23 : f32 to vector<3x256xf32>
    %59 = arith.maximumf %58, %57 : vector<3x256xf32>
    %60 = vector.broadcast %cst_24 : f32 to vector<3x256xf32>
    %61 = arith.minimumf %60, %59 : vector<3x256xf32>
    %62 = arith.mulf %61, %61 : vector<3x256xf32>
    %cst_25 = arith.constant 1.000000e+00 : f32
    %63 = arith.subf %cst_25, %2 : f32
    %64 = vector.broadcast %63 : f32 to vector<3x256xf32>
    %65 = arith.mulf %62, %64 : vector<3x256xf32>
    %cst_26 = arith.constant 1.000000e+00 : f32
    %66 = vector.broadcast %cst_26 : f32 to vector<3x256xf32>
    %67 = arith.subf %66, %65 : vector<3x256xf32>
    %68 = arith.mulf %57, %67 : vector<3x256xf32>
    %cst_27 = arith.constant 0.000000e+00 : f32
    %cst_28 = arith.constant 1.000000e+00 : f32
    %69 = vector.broadcast %cst_27 : f32 to vector<3x256xf32>
    %70 = arith.maximumf %69, %68 : vector<3x256xf32>
    %71 = vector.broadcast %cst_28 : f32 to vector<3x256xf32>
    %72 = arith.minimumf %71, %70 : vector<3x256xf32>
    %cst_29 = arith.constant 1.000000e-07 : f32
    %cst_30 = arith.constant 1.000000e+00 : f32
    %73 = vector.broadcast %cst_29 : f32 to vector<3x256xf32>
    %74 = arith.maximumf %73, %72 : vector<3x256xf32>
    %75 = vector.broadcast %cst_30 : f32 to vector<3x256xf32>
    %76 = arith.minimumf %75, %74 : vector<3x256xf32>
    %77 = math.log %76 : vector<3x256xf32>
    %78 = vector.broadcast %3 : f32 to vector<3x256xf32>
    %79 = arith.mulf %78, %77 : vector<3x256xf32>
    %80 = math.exp %79 : vector<3x256xf32>
    %81 = vector.extract_strided_slice %80 {offsets = [0, 0], sizes = [1, 256], strides = [1, 1]} : vector<3x256xf32> to vector<1x256xf32>
    %cst_31 = arith.constant 2.990000e-01 : f32
    %82 = vector.broadcast %cst_31 : f32 to vector<1x256xf32>
    %83 = arith.mulf %82, %81 : vector<1x256xf32>
    %84 = vector.extract_strided_slice %80 {offsets = [1, 0], sizes = [1, 256], strides = [1, 1]} : vector<3x256xf32> to vector<1x256xf32>
    %cst_32 = arith.constant 5.870000e-01 : f32
    %85 = vector.broadcast %cst_32 : f32 to vector<1x256xf32>
    %86 = arith.mulf %85, %84 : vector<1x256xf32>
    %87 = arith.addf %83, %86 : vector<1x256xf32>
    %88 = vector.extract_strided_slice %80 {offsets = [2, 0], sizes = [1, 256], strides = [1, 1]} : vector<3x256xf32> to vector<1x256xf32>
    %cst_33 = arith.constant 1.140000e-01 : f32
    %89 = vector.broadcast %cst_33 : f32 to vector<1x256xf32>
    %90 = arith.mulf %89, %88 : vector<1x256xf32>
    %91 = arith.addf %87, %90 : vector<1x256xf32>
    %92 = vector.broadcast %91 : vector<1x256xf32> to vector<3x256xf32>
    %93 = arith.subf %80, %92 : vector<3x256xf32>
    %94 = vector.broadcast %4 : f32 to vector<3x256xf32>
    %95 = arith.mulf %94, %93 : vector<3x256xf32>
    %96 = vector.broadcast %91 : vector<1x256xf32> to vector<3x256xf32>
    %97 = arith.addf %96, %95 : vector<3x256xf32>
    %c0_34 = arith.constant 0 : index
    %c0_35 = arith.constant 0 : index
    %98 = vector.load %arg5[%c0_34, %c0_35] : memref<3x1xf32, #tpu.memory_space<vmem>>, vector<3x1xf32>
    %99 = vector.broadcast %98 : vector<3x1xf32> to vector<3x256xf32>
    %100 = arith.mulf %97, %99 : vector<3x256xf32>
    %cst_36 = arith.constant 0.000000e+00 : f32
    %cst_37 = arith.constant 1.000000e+00 : f32
    %101 = vector.broadcast %cst_36 : f32 to vector<3x256xf32>
    %102 = arith.maximumf %101, %100 : vector<3x256xf32>
    %103 = vector.broadcast %cst_37 : f32 to vector<3x256xf32>
    %104 = arith.minimumf %103, %102 : vector<3x256xf32>
    %c0_38 = arith.constant 0 : index
    %c0_39 = arith.constant 0 : index
    %c0_40 = arith.constant 0 : index
    %105 = vector.load %arg12[%c0_38, %c0_39, %c0_40] : memref<1x3x256xf32, #tpu.memory_space<vmem>>, vector<1x3x256xf32>
    %106 = vector.shape_cast %105 : vector<1x3x256xf32> to vector<3x256xf32>
    %107 = vector.shape_cast %104 : vector<3x256xf32> to vector<1x3x256xf32>
    tpu.vector_store %arg12[%c0_38, %c0_39, %c0_40], %107 {strides = array<i32>} : memref<1x3x256xf32, #tpu.memory_space<vmem>>, vector<1x3x256xf32>,
    %108 = tpu.iota {dimensions = array<i32: 1>} : vector<1x256xi32>
    %c16_i32 = arith.constant 16 : i32
    %c0_i32 = arith.constant 0 : i32
    %109 = arith.cmpi eq, %c16_i32, %c0_i32 : i32
    %c1_i32 = arith.constant 1 : i32
    %110 = arith.select %109, %c1_i32, %c16_i32 : i32
    %111 = vector.broadcast %110 : i32 to vector<1x256xi32>
    %112 = arith.remsi %108, %111 : vector<1x256xi32>
    %c0_i32_41 = arith.constant 0 : i32
    %113 = vector.broadcast %c0_i32_41 : i32 to vector<1x256xi32>
    %114 = arith.cmpi ne, %112, %113 : vector<1x256xi32>
    %c0_i32_42 = arith.constant 0 : i32
    %115 = vector.broadcast %c0_i32_42 : i32 to vector<1x256xi32>
    %116 = arith.cmpi slt, %112, %115 : vector<1x256xi32>
    %c0_i32_43 = arith.constant 0 : i32
    %117 = arith.cmpi slt, %110, %c0_i32_43 : i32
    %118 = vector.broadcast %117 : i1 to vector<1x256xi1>
    %119 = vector.broadcast %118 : vector<1x256xi1> to vector<1x256xi1>
    %120 = arith.xori %116, %119 : vector<1x256xi1>
    %121 = arith.andi %120, %114 : vector<1x256xi1>
    %122 = vector.broadcast %110 : i32 to vector<1x256xi32>
    %123 = arith.addi %112, %122 : vector<1x256xi32>
    %124 = arith.select %121, %123, %112 : vector<1x256xi1>, vector<1x256xi32>
    %c0_i32_44 = arith.constant 0 : i32
    %125 = vector.broadcast %c0_i32_44 : i32 to vector<1x256xi32>
    %126 = arith.cmpi ne, %124, %125 : vector<1x256xi32>
    %c15_i32 = arith.constant 15 : i32
    %127 = vector.broadcast %c15_i32 : i32 to vector<1x256xi32>
    %128 = arith.cmpi ne, %124, %127 : vector<1x256xi32>
    %129 = tpu.concatenate %15, %104 in 0 : vector<3x256xf32>, vector<3x256xf32> -> vector<6x256xf32>
    %130 = arith.truncf %129 : vector<6x256xf32> to vector<6x256xbf16>
    %cst_45 = arith.constant 0.000000e+00 : bf16
    %131 = vector.shape_cast %128 : vector<1x256xi1> to vector<1x256xi1>
    %132 = vector.broadcast %131 : vector<1x256xi1> to vector<6x256xi1>
    %133 = vector.broadcast %cst_45 : bf16 to vector<6x256xbf16>
    %134 = arith.select %132, %130, %133 : vector<6x256xi1>, vector<6x256xbf16>
    %c0_46 = arith.constant 0 : index
    %c129 = arith.constant 129 : index
    %135 = vector.load %arg13[%c0_46, %c129] : memref<18x512xbf16, #tpu.memory_space<vmem>>, vector<6x256xbf16>
    tpu.vector_store %arg13[%c0_46, %c129], %134 {strides = array<i32>} : memref<18x512xbf16, #tpu.memory_space<vmem>>, vector<6x256xbf16>,
    %c6 = arith.constant 6 : index
    %c128 = arith.constant 128 : index
    %136 = vector.load %arg13[%c6, %c128] : memref<18x512xbf16, #tpu.memory_space<vmem>>, vector<6x256xbf16>
    tpu.vector_store %arg13[%c6, %c128], %130 {strides = array<i32>} : memref<18x512xbf16, #tpu.memory_space<vmem>>, vector<6x256xbf16>,
    %cst_47 = arith.constant 0.000000e+00 : bf16
    %137 = vector.shape_cast %126 : vector<1x256xi1> to vector<1x256xi1>
    %138 = vector.broadcast %137 : vector<1x256xi1> to vector<6x256xi1>
    %139 = vector.broadcast %cst_47 : bf16 to vector<6x256xbf16>
    %140 = arith.select %138, %130, %139 : vector<6x256xi1>, vector<6x256xbf16>
    %c12 = arith.constant 12 : index
    %c127 = arith.constant 127 : index
    %141 = vector.load %arg13[%c12, %c127] : memref<18x512xbf16, #tpu.memory_space<vmem>>, vector<6x256xbf16>
    tpu.vector_store %arg13[%c12, %c127], %140 {strides = array<i32>} : memref<18x512xbf16, #tpu.memory_space<vmem>>, vector<6x256xbf16>,
    %c0_48 = arith.constant 0 : index
    %c0_49 = arith.constant 0 : index
    %c0_50 = arith.constant 0 : index
    %142 = vector.load %arg6[%c0_48, %c0_49, %c0_50] : memref<3x32x18xbf16, #tpu.memory_space<vmem>>, vector<1x32x18xbf16>
    %143 = vector.shape_cast %142 : vector<1x32x18xbf16> to vector<32x18xbf16>
    %c0_51 = arith.constant 0 : index
    %c112 = arith.constant 112 : index
    %144 = vector.load %arg13[%c0_51, %c112] : memref<18x512xbf16, #tpu.memory_space<vmem>>, vector<18x256xbf16>
    %cst_52 = arith.constant dense<0.000000e+00> : vector<32x256xf32>
    %145 = tpu.matmul %143, %144, %cst_52 {dimension_numbers = #tpu.dot_dimension_numbers<[1], [0], [0], [1], [0, 0, 1, 1], [], []>} : vector<32x18xbf16>, vector<18x256xbf16>, vector<32x256xf32> -> vector<32x256xf32>
    %c1_53 = arith.constant 1 : index
    %c0_54 = arith.constant 0 : index
    %c0_55 = arith.constant 0 : index
    %146 = vector.load %arg6[%c1_53, %c0_54, %c0_55] : memref<3x32x18xbf16, #tpu.memory_space<vmem>>, vector<1x32x18xbf16>
    %147 = vector.shape_cast %146 : vector<1x32x18xbf16> to vector<32x18xbf16>
    %c0_56 = arith.constant 0 : index
    %c128_57 = arith.constant 128 : index
    %148 = vector.load %arg13[%c0_56, %c128_57] : memref<18x512xbf16, #tpu.memory_space<vmem>>, vector<18x256xbf16>
    %cst_58 = arith.constant dense<0.000000e+00> : vector<32x256xf32>
    %149 = tpu.matmul %147, %148, %cst_58 {dimension_numbers = #tpu.dot_dimension_numbers<[1], [0], [0], [1], [0, 0, 1, 1], [], []>} : vector<32x18xbf16>, vector<18x256xbf16>, vector<32x256xf32> -> vector<32x256xf32>
    %150 = arith.addf %145, %149 : vector<32x256xf32>
    %c2_59 = arith.constant 2 : index
    %c0_60 = arith.constant 0 : index
    %c0_61 = arith.constant 0 : index
    %151 = vector.load %arg6[%c2_59, %c0_60, %c0_61] : memref<3x32x18xbf16, #tpu.memory_space<vmem>>, vector<1x32x18xbf16>
    %152 = vector.shape_cast %151 : vector<1x32x18xbf16> to vector<32x18xbf16>
    %c0_62 = arith.constant 0 : index
    %c144 = arith.constant 144 : index
    %153 = vector.load %arg13[%c0_62, %c144] : memref<18x512xbf16, #tpu.memory_space<vmem>>, vector<18x256xbf16>
    %cst_63 = arith.constant dense<0.000000e+00> : vector<32x256xf32>
    %154 = tpu.matmul %152, %153, %cst_63 {dimension_numbers = #tpu.dot_dimension_numbers<[1], [0], [0], [1], [0, 0, 1, 1], [], []>} : vector<32x18xbf16>, vector<18x256xbf16>, vector<32x256xf32> -> vector<32x256xf32>
    %155 = arith.addf %150, %154 : vector<32x256xf32>
    %c0_64 = arith.constant 0 : index
    %c0_65 = arith.constant 0 : index
    %156 = vector.load %arg7[%c0_64, %c0_65] : memref<32x1xf32, #tpu.memory_space<vmem>>, vector<32x1xf32>
    %157 = vector.broadcast %156 : vector<32x1xf32> to vector<32x256xf32>
    %158 = arith.addf %155, %157 : vector<32x256xf32>
    %cst_66 = arith.constant 0.000000e+00 : f32
    %159 = vector.broadcast %cst_66 : f32 to vector<32x256xf32>
    %160 = arith.maximumf %158, %159 : vector<32x256xf32>
    %161 = arith.truncf %160 : vector<32x256xf32> to vector<32x256xbf16>
    %cst_67 = arith.constant 0.000000e+00 : bf16
    %162 = vector.shape_cast %128 : vector<1x256xi1> to vector<1x256xi1>
    %163 = vector.broadcast %162 : vector<1x256xi1> to vector<32x256xi1>
    %164 = vector.broadcast %cst_67 : bf16 to vector<32x256xbf16>
    %165 = arith.select %163, %161, %164 : vector<32x256xi1>, vector<32x256xbf16>
    %c0_68 = arith.constant 0 : index
    %c129_69 = arith.constant 129 : index
    %166 = vector.load %arg14[%c0_68, %c129_69] : memref<96x512xbf16, #tpu.memory_space<vmem>>, vector<32x256xbf16>
    tpu.vector_store %arg14[%c0_68, %c129_69], %165 {strides = array<i32>} : memref<96x512xbf16, #tpu.memory_space<vmem>>, vector<32x256xbf16>,
    %c32 = arith.constant 32 : index
    %c128_70 = arith.constant 128 : index
    %167 = vector.load %arg14[%c32, %c128_70] : memref<96x512xbf16, #tpu.memory_space<vmem>>, vector<32x256xbf16>
    tpu.vector_store %arg14[%c32, %c128_70], %161 {strides = array<i32>} : memref<96x512xbf16, #tpu.memory_space<vmem>>, vector<32x256xbf16>,
    %cst_71 = arith.constant 0.000000e+00 : bf16
    %168 = vector.shape_cast %126 : vector<1x256xi1> to vector<1x256xi1>
    %169 = vector.broadcast %168 : vector<1x256xi1> to vector<32x256xi1>
    %170 = vector.broadcast %cst_71 : bf16 to vector<32x256xbf16>
    %171 = arith.select %169, %161, %170 : vector<32x256xi1>, vector<32x256xbf16>
    %c64 = arith.constant 64 : index
    %c127_72 = arith.constant 127 : index
    %172 = vector.load %arg14[%c64, %c127_72] : memref<96x512xbf16, #tpu.memory_space<vmem>>, vector<32x256xbf16>
    tpu.vector_store %arg14[%c64, %c127_72], %171 {strides = array<i32>} : memref<96x512xbf16, #tpu.memory_space<vmem>>, vector<32x256xbf16>,
    %c0_73 = arith.constant 0 : index
    %c0_74 = arith.constant 0 : index
    %c0_75 = arith.constant 0 : index
    %173 = vector.load %arg8[%c0_73, %c0_74, %c0_75] : memref<3x32x96xbf16, #tpu.memory_space<vmem>>, vector<1x32x96xbf16>
    %174 = vector.shape_cast %173 : vector<1x32x96xbf16> to vector<32x96xbf16>
    %c0_76 = arith.constant 0 : index
    %c112_77 = arith.constant 112 : index
    %175 = vector.load %arg14[%c0_76, %c112_77] : memref<96x512xbf16, #tpu.memory_space<vmem>>, vector<96x256xbf16>
    %cst_78 = arith.constant dense<0.000000e+00> : vector<32x256xf32>
    %176 = tpu.matmul %174, %175, %cst_78 {dimension_numbers = #tpu.dot_dimension_numbers<[1], [0], [0], [1], [0, 0, 1, 1], [], []>} : vector<32x96xbf16>, vector<96x256xbf16>, vector<32x256xf32> -> vector<32x256xf32>
    %c1_79 = arith.constant 1 : index
    %c0_80 = arith.constant 0 : index
    %c0_81 = arith.constant 0 : index
    %177 = vector.load %arg8[%c1_79, %c0_80, %c0_81] : memref<3x32x96xbf16, #tpu.memory_space<vmem>>, vector<1x32x96xbf16>
    %178 = vector.shape_cast %177 : vector<1x32x96xbf16> to vector<32x96xbf16>
    %c0_82 = arith.constant 0 : index
    %c128_83 = arith.constant 128 : index
    %179 = vector.load %arg14[%c0_82, %c128_83] : memref<96x512xbf16, #tpu.memory_space<vmem>>, vector<96x256xbf16>
    %cst_84 = arith.constant dense<0.000000e+00> : vector<32x256xf32>
    %180 = tpu.matmul %178, %179, %cst_84 {dimension_numbers = #tpu.dot_dimension_numbers<[1], [0], [0], [1], [0, 0, 1, 1], [], []>} : vector<32x96xbf16>, vector<96x256xbf16>, vector<32x256xf32> -> vector<32x256xf32>
    %181 = arith.addf %176, %180 : vector<32x256xf32>
    %c2_85 = arith.constant 2 : index
    %c0_86 = arith.constant 0 : index
    %c0_87 = arith.constant 0 : index
    %182 = vector.load %arg8[%c2_85, %c0_86, %c0_87] : memref<3x32x96xbf16, #tpu.memory_space<vmem>>, vector<1x32x96xbf16>
    %183 = vector.shape_cast %182 : vector<1x32x96xbf16> to vector<32x96xbf16>
    %c0_88 = arith.constant 0 : index
    %c144_89 = arith.constant 144 : index
    %184 = vector.load %arg14[%c0_88, %c144_89] : memref<96x512xbf16, #tpu.memory_space<vmem>>, vector<96x256xbf16>
    %cst_90 = arith.constant dense<0.000000e+00> : vector<32x256xf32>
    %185 = tpu.matmul %183, %184, %cst_90 {dimension_numbers = #tpu.dot_dimension_numbers<[1], [0], [0], [1], [0, 0, 1, 1], [], []>} : vector<32x96xbf16>, vector<96x256xbf16>, vector<32x256xf32> -> vector<32x256xf32>
    %186 = arith.addf %181, %185 : vector<32x256xf32>
    %c0_91 = arith.constant 0 : index
    %c0_92 = arith.constant 0 : index
    %187 = vector.load %arg9[%c0_91, %c0_92] : memref<32x1xf32, #tpu.memory_space<vmem>>, vector<32x1xf32>
    %188 = vector.broadcast %187 : vector<32x1xf32> to vector<32x256xf32>
    %189 = arith.addf %186, %188 : vector<32x256xf32>
    %cst_93 = arith.constant 0.000000e+00 : f32
    %190 = vector.broadcast %cst_93 : f32 to vector<32x256xf32>
    %191 = arith.maximumf %189, %190 : vector<32x256xf32>
    %192 = arith.truncf %191 : vector<32x256xf32> to vector<32x256xbf16>
    %cst_94 = arith.constant 0.000000e+00 : bf16
    %193 = vector.shape_cast %128 : vector<1x256xi1> to vector<1x256xi1>
    %194 = vector.broadcast %193 : vector<1x256xi1> to vector<32x256xi1>
    %195 = vector.broadcast %cst_94 : bf16 to vector<32x256xbf16>
    %196 = arith.select %194, %192, %195 : vector<32x256xi1>, vector<32x256xbf16>
    %c0_95 = arith.constant 0 : index
    %c129_96 = arith.constant 129 : index
    %197 = vector.load %arg14[%c0_95, %c129_96] : memref<96x512xbf16, #tpu.memory_space<vmem>>, vector<32x256xbf16>
    tpu.vector_store %arg14[%c0_95, %c129_96], %196 {strides = array<i32>} : memref<96x512xbf16, #tpu.memory_space<vmem>>, vector<32x256xbf16>,
    %c32_97 = arith.constant 32 : index
    %c128_98 = arith.constant 128 : index
    %198 = vector.load %arg14[%c32_97, %c128_98] : memref<96x512xbf16, #tpu.memory_space<vmem>>, vector<32x256xbf16>
    tpu.vector_store %arg14[%c32_97, %c128_98], %192 {strides = array<i32>} : memref<96x512xbf16, #tpu.memory_space<vmem>>, vector<32x256xbf16>,
    %cst_99 = arith.constant 0.000000e+00 : bf16
    %199 = vector.shape_cast %126 : vector<1x256xi1> to vector<1x256xi1>
    %200 = vector.broadcast %199 : vector<1x256xi1> to vector<32x256xi1>
    %201 = vector.broadcast %cst_99 : bf16 to vector<32x256xbf16>
    %202 = arith.select %200, %192, %201 : vector<32x256xi1>, vector<32x256xbf16>
    %c64_100 = arith.constant 64 : index
    %c127_101 = arith.constant 127 : index
    %203 = vector.load %arg14[%c64_100, %c127_101] : memref<96x512xbf16, #tpu.memory_space<vmem>>, vector<32x256xbf16>
    tpu.vector_store %arg14[%c64_100, %c127_101], %202 {strides = array<i32>} : memref<96x512xbf16, #tpu.memory_space<vmem>>, vector<32x256xbf16>,
    %c0_102 = arith.constant 0 : index
    %c0_103 = arith.constant 0 : index
    %c0_104 = arith.constant 0 : index
    %204 = vector.load %arg10[%c0_102, %c0_103, %c0_104] : memref<3x3x96xbf16, #tpu.memory_space<vmem>>, vector<1x3x96xbf16>
    %205 = vector.shape_cast %204 : vector<1x3x96xbf16> to vector<3x96xbf16>
    %c0_105 = arith.constant 0 : index
    %c112_106 = arith.constant 112 : index
    %206 = vector.load %arg14[%c0_105, %c112_106] : memref<96x512xbf16, #tpu.memory_space<vmem>>, vector<96x256xbf16>
    %cst_107 = arith.constant dense<0.000000e+00> : vector<3x256xf32>
    %207 = tpu.matmul %205, %206, %cst_107 {dimension_numbers = #tpu.dot_dimension_numbers<[1], [0], [0], [1], [0, 0, 1, 1], [], []>} : vector<3x96xbf16>, vector<96x256xbf16>, vector<3x256xf32> -> vector<3x256xf32>
    %c1_108 = arith.constant 1 : index
    %c0_109 = arith.constant 0 : index
    %c0_110 = arith.constant 0 : index
    %208 = vector.load %arg10[%c1_108, %c0_109, %c0_110] : memref<3x3x96xbf16, #tpu.memory_space<vmem>>, vector<1x3x96xbf16>
    %209 = vector.shape_cast %208 : vector<1x3x96xbf16> to vector<3x96xbf16>
    %c0_111 = arith.constant 0 : index
    %c128_112 = arith.constant 128 : index
    %210 = vector.load %arg14[%c0_111, %c128_112] : memref<96x512xbf16, #tpu.memory_space<vmem>>, vector<96x256xbf16>
    %cst_113 = arith.constant dense<0.000000e+00> : vector<3x256xf32>
    %211 = tpu.matmul %209, %210, %cst_113 {dimension_numbers = #tpu.dot_dimension_numbers<[1], [0], [0], [1], [0, 0, 1, 1], [], []>} : vector<3x96xbf16>, vector<96x256xbf16>, vector<3x256xf32> -> vector<3x256xf32>
    %212 = arith.addf %207, %211 : vector<3x256xf32>
    %c2_114 = arith.constant 2 : index
    %c0_115 = arith.constant 0 : index
    %c0_116 = arith.constant 0 : index
    %213 = vector.load %arg10[%c2_114, %c0_115, %c0_116] : memref<3x3x96xbf16, #tpu.memory_space<vmem>>, vector<1x3x96xbf16>
    %214 = vector.shape_cast %213 : vector<1x3x96xbf16> to vector<3x96xbf16>
    %c0_117 = arith.constant 0 : index
    %c144_118 = arith.constant 144 : index
    %215 = vector.load %arg14[%c0_117, %c144_118] : memref<96x512xbf16, #tpu.memory_space<vmem>>, vector<96x256xbf16>
    %cst_119 = arith.constant dense<0.000000e+00> : vector<3x256xf32>
    %216 = tpu.matmul %214, %215, %cst_119 {dimension_numbers = #tpu.dot_dimension_numbers<[1], [0], [0], [1], [0, 0, 1, 1], [], []>} : vector<3x96xbf16>, vector<96x256xbf16>, vector<3x256xf32> -> vector<3x256xf32>
    %217 = arith.addf %212, %216 : vector<3x256xf32>
    %c0_120 = arith.constant 0 : index
    %c0_121 = arith.constant 0 : index
    %218 = vector.load %arg11[%c0_120, %c0_121] : memref<3x1xf32, #tpu.memory_space<vmem>>, vector<3x1xf32>
    %219 = vector.broadcast %218 : vector<3x1xf32> to vector<3x256xf32>
    %220 = arith.addf %217, %219 : vector<3x256xf32>
    %221 = math.tanh %220 : vector<3x256xf32>
    %c0_122 = arith.constant 0 : index
    %c0_123 = arith.constant 0 : index
    %c0_124 = arith.constant 0 : index
    %222 = vector.load %arg12[%c0_122, %c0_123, %c0_124] : memref<1x3x256xf32, #tpu.memory_space<vmem>>, vector<1x3x256xf32>
    %223 = vector.shape_cast %222 : vector<1x3x256xf32> to vector<3x256xf32>
    %224 = vector.broadcast %5 : f32 to vector<3x256xf32>
    %225 = arith.mulf %224, %221 : vector<3x256xf32>
    %226 = arith.addf %223, %225 : vector<3x256xf32>
    %cst_125 = arith.constant 0.000000e+00 : f32
    %cst_126 = arith.constant 1.000000e+00 : f32
    %227 = vector.broadcast %cst_125 : f32 to vector<3x256xf32>
    %228 = arith.maximumf %227, %226 : vector<3x256xf32>
    %229 = vector.broadcast %cst_126 : f32 to vector<3x256xf32>
    %230 = arith.minimumf %229, %228 : vector<3x256xf32>
    %c0_127 = arith.constant 0 : index
    %c0_128 = arith.constant 0 : index
    %c0_129 = arith.constant 0 : index
    %231 = vector.load %arg12[%c0_127, %c0_128, %c0_129] : memref<1x3x256xf32, #tpu.memory_space<vmem>>, vector<1x3x256xf32>
    %232 = vector.shape_cast %231 : vector<1x3x256xf32> to vector<3x256xf32>
    %233 = vector.shape_cast %230 : vector<3x256xf32> to vector<1x3x256xf32>
    tpu.vector_store %arg12[%c0_127, %c0_128, %c0_129], %233 {strides = array<i32>} : memref<1x3x256xf32, #tpu.memory_space<vmem>>, vector<1x3x256xf32>,
    return
  }
  func.func @transform_0(%arg0: i32) -> i32 {
    %c0_i32 = arith.constant 0 : i32
    %c0_i32_0 = arith.constant 0 : i32
    return %c0_i32 : i32
  }
  func.func @transform_1(%arg0: i32) -> (i32, i32, i32) {
    %c0_i32 = arith.constant 0 : i32
    %c0_i32_0 = arith.constant 0 : i32
    %c0_i32_1 = arith.constant 0 : i32
    return %arg0, %c0_i32, %c0_i32_0 : i32, i32, i32
  }
  func.func @transform_2(%arg0: i32) -> (i32, i32) {
    %c0_i32 = arith.constant 0 : i32
    %c0_i32_0 = arith.constant 0 : i32
    %c0_i32_1 = arith.constant 0 : i32
    return %c0_i32, %c0_i32_0 : i32, i32
  }
  func.func @transform_3(%arg0: i32) -> (i32, i32) {
    %c0_i32 = arith.constant 0 : i32
    %c0_i32_0 = arith.constant 0 : i32
    %c0_i32_1 = arith.constant 0 : i32
    return %c0_i32, %c0_i32_0 : i32, i32
  }
  func.func @transform_4(%arg0: i32) -> (i32, i32) {
    %c0_i32 = arith.constant 0 : i32
    %c0_i32_0 = arith.constant 0 : i32
    %c0_i32_1 = arith.constant 0 : i32
    return %c0_i32, %c0_i32_0 : i32, i32
  }
  func.func @transform_5(%arg0: i32) -> (i32, i32, i32) {
    %c0_i32 = arith.constant 0 : i32
    %c0_i32_0 = arith.constant 0 : i32
    %c0_i32_1 = arith.constant 0 : i32
    %c0_i32_2 = arith.constant 0 : i32
    return %c0_i32, %c0_i32_0, %c0_i32_1 : i32, i32, i32
  }
  func.func @transform_6(%arg0: i32) -> (i32, i32) {
    %c0_i32 = arith.constant 0 : i32
    %c0_i32_0 = arith.constant 0 : i32
    %c0_i32_1 = arith.constant 0 : i32
    return %c0_i32, %c0_i32_0 : i32, i32
  }
  func.func @transform_7(%arg0: i32) -> (i32, i32, i32) {
    %c0_i32 = arith.constant 0 : i32
    %c0_i32_0 = arith.constant 0 : i32
    %c0_i32_1 = arith.constant 0 : i32
    %c0_i32_2 = arith.constant 0 : i32
    return %c0_i32, %c0_i32_0, %c0_i32_1 : i32, i32, i32
  }
  func.func @transform_8(%arg0: i32) -> (i32, i32) {
    %c0_i32 = arith.constant 0 : i32
    %c0_i32_0 = arith.constant 0 : i32
    %c0_i32_1 = arith.constant 0 : i32
    return %c0_i32, %c0_i32_0 : i32, i32
  }
  func.func @transform_9(%arg0: i32) -> (i32, i32, i32) {
    %c0_i32 = arith.constant 0 : i32
    %c0_i32_0 = arith.constant 0 : i32
    %c0_i32_1 = arith.constant 0 : i32
    %c0_i32_2 = arith.constant 0 : i32
    return %c0_i32, %c0_i32_0, %c0_i32_1 : i32, i32, i32
  }
  func.func @transform_10(%arg0: i32) -> (i32, i32) {
    %c0_i32 = arith.constant 0 : i32
    %c0_i32_0 = arith.constant 0 : i32
    %c0_i32_1 = arith.constant 0 : i32
    return %c0_i32, %c0_i32_0 : i32, i32
  }
  func.func @transform_11(%arg0: i32) -> (i32, i32, i32) {
    %c0_i32 = arith.constant 0 : i32
    %c0_i32_0 = arith.constant 0 : i32
    %c0_i32_1 = arith.constant 0 : i32
    return %arg0, %c0_i32, %c0_i32_0 : i32, i32, i32
  }
}

</mosaic_0001>

<llo_original>
// kernel: tpu_custom_call.1
$region0: #{tpu_custom_call.1}
  #allocation0 [shape = 'u32[]', space=smem, size = 0x4, offset = 0x4, fixed_abs, tag = 'smem constant byte address 0x4 - core index']
  #allocation1 [shape = 'u32[72,128]{1,0:T(1,128)}', space=vmem, size = 0x9000, scoped, tag = 'internal scratch']
  #allocation2 [shape = 'bf16[18,512]{1,0:T(8,128)(2,1)}', space=vmem, size = 0x6000, scoped, tag = 'scratch operand']
  #allocation3 [shape = 'bf16[96,512]{1,0:T(8,128)(2,1)}', space=vmem, size = 0x18000, scoped, tag = 'scratch operand']
  %s0 = inlined_call_operand.vmem [shape: f32[6], index: 0, kind: input, shape index: {}]
  %s1 = inlined_call_operand.vmem [shape: f32[2,3,256], index: 1, kind: input, shape index: {}]
  %s2 = inlined_call_operand.vmem [shape: f32[3,3], index: 2, kind: input, shape index: {}]
  %s3 = inlined_call_operand.vmem [shape: f32[3,1], index: 3, kind: input, shape index: {}]
  %s4 = inlined_call_operand.vmem [shape: f32[3,1], index: 4, kind: input, shape index: {}]
  %s5 = inlined_call_operand.vmem [shape: bf16[3,32,18], index: 5, kind: input, shape index: {}]
  %s6 = inlined_call_operand.vmem [shape: f32[32,1], index: 6, kind: input, shape index: {}]
  %s7 = inlined_call_operand.vmem [shape: bf16[3,32,96], index: 7, kind: input, shape index: {}]
  %s8 = inlined_call_operand.vmem [shape: f32[32,1], index: 8, kind: input, shape index: {}]
  %s9 = inlined_call_operand.vmem [shape: bf16[3,3,96], index: 9, kind: input, shape index: {}]
  %s10 = inlined_call_operand.vmem [shape: f32[3,1], index: 10, kind: input, shape index: {}]
  %s11 = inlined_call_operand.vmem [shape: f32[2,3,256], index: 11, kind: output, shape index: {}]
  %s12 = sld [smem:[#allocation0]]
  $region81: #{tpu_custom_call.1} parent=0
    _
  %s14 = ssub.s32 1, %s12
  %s15 = scalar_select 0, %s14, %s12
  $region1: #{tpu_custom_call.1} parent=0
    #allocation4 [shape = 'u8[512]{0}', space=smem, size = 0x200, scoped, tag = 'input window, operand 0, single buffered']
    #allocation5 [shape = 's32[2]{0}', space=sflag, size = 0x8, scoped, tag = 'scoped memory for tpu_custom_call.1']
    %16 = vsyncpa [#allocation5], 0
    loop: start=0, step=1, limit=4
    $region2: #{tpu_custom_call.1} parent=1 // loop_pre_header
      _
    $region3: #{tpu_custom_call.1} parent=1 // loop_header
      %s18 = sphi 0, %s22
      %p19 = scmp.ge.s32.totalorder %s18, 4
      %s26 = sphi 0, %s26
      %s28 = sphi 0, %s26
      %s29 = sphi 0, %s28
      %s43 = sphi 0, %s29
      %s49 = sphi 0, %s51
      %s52 = sphi 0, %s49
      %s53 = sphi 0, %s52
      %s69 = sphi 0, %s53
      %s73 = sphi 0, %s73
      %s75 = sphi 0, %s73
      %s76 = sphi 0, %s75
      %s90 = sphi 0, %s76
      %s94 = sphi 0, %s94
      %s96 = sphi 0, %s94
      %s97 = sphi 0, %s96
      %s111 = sphi 0, %s97
      %s115 = sphi 0, %s115
      %s117 = sphi 0, %s115
      %s118 = sphi 0, %s117
      %s132 = sphi 0, %s118
      %s136 = sphi 0, %s136
      %s138 = sphi 0, %s136
      %s139 = sphi 0, %s138
      %s153 = sphi 0, %s139
      %s157 = sphi 0, %s157
      %s159 = sphi 0, %s157
      %s160 = sphi 0, %s159
      %s174 = sphi 0, %s160
      %s178 = sphi 0, %s178
      %s180 = sphi 0, %s178
      %s181 = sphi 0, %s180
      %s195 = sphi 0, %s181
      %s199 = sphi 0, %s199
      %s201 = sphi 0, %s199
      %s202 = sphi 0, %s201
      %s216 = sphi 0, %s202
      %s220 = sphi 0, %s220
      %s222 = sphi 0, %s220
      %s223 = sphi 0, %s222
      %s237 = sphi 0, %s223
      %s241 = sphi 0, %s241
      %s243 = sphi 0, %s241
      %s244 = sphi 0, %s243
      %s258 = sphi 0, %s244
      %s264 = sphi 0, %s266
      %s267 = sphi 0, %s264
      %s268 = sphi 0, %s267
      %s284 = sphi 0, %s268
    $region4: #{tpu_custom_call.1} parent=1 // loop_header_branch
      %21 = sbr.rel (%p19) target = $region8
    $region5: #{tpu_custom_call.1} parent=1 // loop_body
      %s23 = ssub.s32 %s18, 1
      %s24 = ssub.s32 %s18, 2
      %s25 = sadd.s32 %s18, 1
      %s27 = sadd.s32 %s26, 1
      %p30 = scmp.eq.s32.totalorder %s18, 1
      %p31 = scmp.ne.s32.totalorder %s26, %s28
      %p32 = scmp.eq.s32.totalorder %s18, 0
      %p33 = por %p31, %p32
      %p34 = scmp.ne.s32.totalorder %s26, %s28
      %p35 = scmp.eq.s32.totalorder %s23, 1
      %p36 = por %p34, %p35
      %p37 = scmp.ne.s32.totalorder %s28, %s29
      %p38 = scmp.eq.s32.totalorder %s23, 0
      %p39 = por %p37, %p38
      %p40 = scmp.ne.s32.totalorder %s28, %s29
      %p41 = scmp.eq.s32.totalorder %s24, 1
      %p42 = por %p40, %p41
      %p44 = scmp.ne.s32.totalorder %s29, %s43
      %p45 = scmp.eq.s32.totalorder %s24, 0
      %p46 = por %p44, %p45
      %s47 = ssub.s32 %s18, %s25
      %p48 = scmp.eq.s32.totalorder %s47, 0
      %s50 = sadd.s32 %s49, 1
      %s51 = scalar_select %p48, %s49, %s50
      %p54 = pneg %p48
      %p55 = scmp.eq.s32.totalorder %s18, 1
      %p56 = por %p54, %p55
      %p57 = scmp.ne.s32.totalorder %s49, %s52
      %p58 = scmp.eq.s32.totalorder %s18, 0
      %p59 = por %p57, %p58
      %p60 = scmp.ne.s32.totalorder %s49, %s52
      %p61 = scmp.eq.s32.totalorder %s23, 1
      %p62 = por %p60, %p61
      %p63 = scmp.ne.s32.totalorder %s52, %s53
      %p64 = scmp.eq.s32.totalorder %s23, 0
      %p65 = por %p63, %p64
      %p66 = scmp.ne.s32.totalorder %s52, %s53
      %p67 = scmp.eq.s32.totalorder %s24, 1
      %p68 = por %p66, %p67
      %p70 = scmp.ne.s32.totalorder %s53, %s69
      %p71 = scmp.eq.s32.totalorder %s24, 0
      %p72 = por %p70, %p71
      %s74 = sadd.s32 %s73, 1
      %p77 = scmp.eq.s32.totalorder %s18, 1
      %p78 = scmp.ne.s32.totalorder %s73, %s75
      %p79 = scmp.eq.s32.totalorder %s18, 0
      %p80 = por %p78, %p79
      %p81 = scmp.ne.s32.totalorder %s73, %s75
      %p82 = scmp.eq.s32.totalorder %s23, 1
      %p83 = por %p81, %p82
      %p84 = scmp.ne.s32.totalorder %s75, %s76
      %p85 = scmp.eq.s32.totalorder %s23, 0
      %p86 = por %p84, %p85
      %p87 = scmp.ne.s32.totalorder %s75, %s76
      %p88 = scmp.eq.s32.totalorder %s24, 1
      %p89 = por %p87, %p88
      %p91 = scmp.ne.s32.totalorder %s76, %s90
      %p92 = scmp.eq.s32.totalorder %s24, 0
      %p93 = por %p91, %p92
      %s95 = sadd.s32 %s94, 1
      %p98 = scmp.eq.s32.totalorder %s18, 1
      %p99 = scmp.ne.s32.totalorder %s94, %s96
      %p100 = scmp.eq.s32.totalorder %s18, 0
      %p101 = por %p99, %p100
      %p102 = scmp.ne.s32.totalorder %s94, %s96
      %p103 = scmp.eq.s32.totalorder %s23, 1
      %p104 = por %p102, %p103
      %p105 = scmp.ne.s32.totalorder %s96, %s97
      %p106 = scmp.eq.s32.totalorder %s23, 0
      %p107 = por %p105, %p106
      %p108 = scmp.ne.s32.totalorder %s96, %s97
      %p109 = scmp.eq.s32.totalorder %s24, 1
      %p110 = por %p108, %p109
      %p112 = scmp.ne.s32.totalorder %s97, %s111
      %p113 = scmp.eq.s32.totalorder %s24, 0
      %p114 = por %p112, %p113
      %s116 = sadd.s32 %s115, 1
      %p119 = scmp.eq.s32.totalorder %s18, 1
      %p120 = scmp.ne.s32.totalorder %s115, %s117
      %p121 = scmp.eq.s32.totalorder %s18, 0
      %p122 = por %p120, %p121
      %p123 = scmp.ne.s32.totalorder %s115, %s117
      %p124 = scmp.eq.s32.totalorder %s23, 1
      %p125 = por %p123, %p124
      %p126 = scmp.ne.s32.totalorder %s117, %s118
      %p127 = scmp.eq.s32.totalorder %s23, 0
      %p128 = por %p126, %p127
      %p129 = scmp.ne.s32.totalorder %s117, %s118
      %p130 = scmp.eq.s32.totalorder %s24, 1
      %p131 = por %p129, %p130
      %p133 = scmp.ne.s32.totalorder %s118, %s132
      %p134 = scmp.eq.s32.totalorder %s24, 0
      %p135 = por %p133, %p134
      %s137 = sadd.s32 %s136, 1
      %p140 = scmp.eq.s32.totalorder %s18, 1
      %p141 = scmp.ne.s32.totalorder %s136, %s138
      %p142 = scmp.eq.s32.totalorder %s18, 0
      %p143 = por %p141, %p142
      %p144 = scmp.ne.s32.totalorder %s136, %s138
      %p145 = scmp.eq.s32.totalorder %s23, 1
      %p146 = por %p144, %p145
      %p147 = scmp.ne.s32.totalorder %s138, %s139
      %p148 = scmp.eq.s32.totalorder %s23, 0
      %p149 = por %p147, %p148
      %p150 = scmp.ne.s32.totalorder %s138, %s139
      %p151 = scmp.eq.s32.totalorder %s24, 1
      %p152 = por %p150, %p151
      %p154 = scmp.ne.s32.totalorder %s139, %s153
      %p155 = scmp.eq.s32.totalorder %s24, 0
      %p156 = por %p154, %p155
      %s158 = sadd.s32 %s157, 1
      %p161 = scmp.eq.s32.totalorder %s18, 1
      %p162 = scmp.ne.s32.totalorder %s157, %s159
      %p163 = scmp.eq.s32.totalorder %s18, 0
      %p164 = por %p162, %p163
      %p165 = scmp.ne.s32.totalorder %s157, %s159
      %p166 = scmp.eq.s32.totalorder %s23, 1
      %p167 = por %p165, %p166
      %p168 = scmp.ne.s32.totalorder %s159, %s160
      %p169 = scmp.eq.s32.totalorder %s23, 0
      %p170 = por %p168, %p169
      %p171 = scmp.ne.s32.totalorder %s159, %s160
      %p172 = scmp.eq.s32.totalorder %s24, 1
      %p173 = por %p171, %p172
      %p175 = scmp.ne.s32.totalorder %s160, %s174
      %p176 = scmp.eq.s32.totalorder %s24, 0
      %p177 = por %p175, %p176
      %s179 = sadd.s32 %s178, 1
      %p182 = scmp.eq.s32.totalorder %s18, 1
      %p183 = scmp.ne.s32.totalorder %s178, %s180
      %p184 = scmp.eq.s32.totalorder %s18, 0
      %p185 = por %p183, %p184
      %p186 = scmp.ne.s32.totalorder %s178, %s180
      %p187 = scmp.eq.s32.totalorder %s23, 1
      %p188 = por %p186, %p187
      %p189 = scmp.ne.s32.totalorder %s180, %s181
      %p190 = scmp.eq.s32.totalorder %s23, 0
      %p191 = por %p189, %p190
      %p192 = scmp.ne.s32.totalorder %s180, %s181
      %p193 = scmp.eq.s32.totalorder %s24, 1
      %p194 = por %p192, %p193
      %p196 = scmp.ne.s32.totalorder %s181, %s195
      %p197 = scmp.eq.s32.totalorder %s24, 0
      %p198 = por %p196, %p197
      %s200 = sadd.s32 %s199, 1
      %p203 = scmp.eq.s32.totalorder %s18, 1
      %p204 = scmp.ne.s32.totalorder %s199, %s201
      %p205 = scmp.eq.s32.totalorder %s18, 0
      %p206 = por %p204, %p205
      %p207 = scmp.ne.s32.totalorder %s199, %s201
      %p208 = scmp.eq.s32.totalorder %s23, 1
      %p209 = por %p207, %p208
      %p210 = scmp.ne.s32.totalorder %s201, %s202
      %p211 = scmp.eq.s32.totalorder %s23, 0
      %p212 = por %p210, %p211
      %p213 = scmp.ne.s32.totalorder %s201, %s202
      %p214 = scmp.eq.s32.totalorder %s24, 1
      %p215 = por %p213, %p214
      %p217 = scmp.ne.s32.totalorder %s202, %s216
      %p218 = scmp.eq.s32.totalorder %s24, 0
      %p219 = por %p217, %p218
      %s221 = sadd.s32 %s220, 1
      %p224 = scmp.eq.s32.totalorder %s18, 1
      %p225 = scmp.ne.s32.totalorder %s220, %s222
      %p226 = scmp.eq.s32.totalorder %s18, 0
      %p227 = por %p225, %p226
      %p228 = scmp.ne.s32.totalorder %s220, %s222
      %p229 = scmp.eq.s32.totalorder %s23, 1
      %p230 = por %p228, %p229
      %p231 = scmp.ne.s32.totalorder %s222, %s223
      %p232 = scmp.eq.s32.totalorder %s23, 0
      %p233 = por %p231, %p232
      %p234 = scmp.ne.s32.totalorder %s222, %s223
      %p235 = scmp.eq.s32.totalorder %s24, 1
      %p236 = por %p234, %p235
      %p238 = scmp.ne.s32.totalorder %s223, %s237
      %p239 = scmp.eq.s32.totalorder %s24, 0
      %p240 = por %p238, %p239
      %s242 = sadd.s32 %s241, 1
      %p245 = scmp.eq.s32.totalorder %s18, 1
      %p246 = scmp.ne.s32.totalorder %s241, %s243
      %p247 = scmp.eq.s32.totalorder %s18, 0
      %p248 = por %p246, %p247
      %p249 = scmp.ne.s32.totalorder %s241, %s243
      %p250 = scmp.eq.s32.totalorder %s23, 1
      %p251 = por %p249, %p250
      %p252 = scmp.ne.s32.totalorder %s243, %s244
      %p253 = scmp.eq.s32.totalorder %s23, 0
      %p254 = por %p252, %p253
      %p255 = scmp.ne.s32.totalorder %s243, %s244
      %p256 = scmp.eq.s32.totalorder %s24, 1
      %p257 = por %p255, %p256
      %p259 = scmp.ne.s32.totalorder %s244, %s258
      %p260 = scmp.eq.s32.totalorder %s24, 0
      %p261 = por %p259, %p260
      %s262 = ssub.s32 %s18, %s25
      %p263 = scmp.eq.s32.totalorder %s262, 0
      %s265 = sadd.s32 %s264, 1
      %s266 = scalar_select %p263, %s264, %s265
      %p269 = pneg %p263
      %p270 = scmp.eq.s32.totalorder %s18, 1
      %p271 = por %p269, %p270
      %p272 = scmp.ne.s32.totalorder %s264, %s267
      %p273 = scmp.eq.s32.totalorder %s18, 0
      %p274 = por %p272, %p273
      %p275 = scmp.ne.s32.totalorder %s264, %s267
      %p276 = scmp.eq.s32.totalorder %s23, 1
      %p277 = por %p275, %p276
      %p278 = scmp.ne.s32.totalorder %s267, %s268
      %p279 = scmp.eq.s32.totalorder %s23, 0
      %p280 = por %p278, %p279
      %p281 = scmp.ne.s32.totalorder %s267, %s268
      %p282 = scmp.eq.s32.totalorder %s24, 1
      %p283 = por %p281, %p282
      %p285 = scmp.ne.s32.totalorder %s268, %s284
      %p286 = scmp.eq.s32.totalorder %s24, 0
      %p287 = por %p285, %p286
      %p288 = scmp.le.s32.totalorder 1, %s18
      %p289 = scmp.lt.s32.totalorder %s18, 3
      %p290 = pnand %p288, %p289
      %p291 = pneg %p290
      // Predicated region
      $region9: #{tpu_custom_call.1} parent=5 // pred_check
        _
      $region10: #{tpu_custom_call.1} parent=5 // pred_check_branch
        %293 = sbr.rel (%p290) target = $region12
      $region11: #{tpu_custom_call.1} parent=5 // pred_region
        %s294 = ssub.s32 %s18, 1
        // Predicated region
        $region13: #{tpu_custom_call.1} parent=11 // pred_check
          %p295 = pneg %p39
        $region14: #{tpu_custom_call.1} parent=11 // pred_check_branch
          %297 = sbr.rel (%p295) target = $region16
        $region15: #{tpu_custom_call.1} parent=11 // pred_region
          %299 = vsyncadd [#allocation5], 0
          %s301 = sshll.u32 %s0, 4
          %s302 = int_to_ptr.vmem [resolvable:$true] %s301
          %304 = dma.vmem_to_smem %s302, 16, [#allocation4], [#allocation5]
        $region16: #{tpu_custom_call.1} parent=11 // pred_fallthru
          _
        // Predicated region
        $region17: #{tpu_custom_call.1} parent=11 // pred_check
          %p305 = pneg %p86
        $region18: #{tpu_custom_call.1} parent=11 // pred_check_branch
          %307 = sbr.rel (%p305) target = $region20
        $region19: #{tpu_custom_call.1} parent=11 // pred_region
          _
        $region20: #{tpu_custom_call.1} parent=11 // pred_fallthru
          _
        // Predicated region
        $region21: #{tpu_custom_call.1} parent=11 // pred_check
          %p308 = pneg %p107
        $region22: #{tpu_custom_call.1} parent=11 // pred_check_branch
          %310 = sbr.rel (%p308) target = $region24
        $region23: #{tpu_custom_call.1} parent=11 // pred_region
          _
        $region24: #{tpu_custom_call.1} parent=11 // pred_fallthru
          _
        // Predicated region
        $region25: #{tpu_custom_call.1} parent=11 // pred_check
          %p311 = pneg %p128
        $region26: #{tpu_custom_call.1} parent=11 // pred_check_branch
          %313 = sbr.rel (%p311) target = $region28
        $region27: #{tpu_custom_call.1} parent=11 // pred_region
          _
        $region28: #{tpu_custom_call.1} parent=11 // pred_fallthru
          _
        // Predicated region
        $region29: #{tpu_custom_call.1} parent=11 // pred_check
          %p314 = pneg %p149
        $region30: #{tpu_custom_call.1} parent=11 // pred_check_branch
          %316 = sbr.rel (%p314) target = $region32
        $region31: #{tpu_custom_call.1} parent=11 // pred_region
          _
        $region32: #{tpu_custom_call.1} parent=11 // pred_fallthru
          _
        // Predicated region
        $region33: #{tpu_custom_call.1} parent=11 // pred_check
          %p317 = pneg %p170
        $region34: #{tpu_custom_call.1} parent=11 // pred_check_branch
          %319 = sbr.rel (%p317) target = $region36
        $region35: #{tpu_custom_call.1} parent=11 // pred_region
          _
        $region36: #{tpu_custom_call.1} parent=11 // pred_fallthru
          _
        // Predicated region
        $region37: #{tpu_custom_call.1} parent=11 // pred_check
          %p320 = pneg %p191
        $region38: #{tpu_custom_call.1} parent=11 // pred_check_branch
          %322 = sbr.rel (%p320) target = $region40
        $region39: #{tpu_custom_call.1} parent=11 // pred_region
          _
        $region40: #{tpu_custom_call.1} parent=11 // pred_fallthru
          _
        // Predicated region
        $region41: #{tpu_custom_call.1} parent=11 // pred_check
          %p323 = pneg %p212
        $region42: #{tpu_custom_call.1} parent=11 // pred_check_branch
          %325 = sbr.rel (%p323) target = $region44
        $region43: #{tpu_custom_call.1} parent=11 // pred_region
          _
        $region44: #{tpu_custom_call.1} parent=11 // pred_fallthru
          _
        // Predicated region
        $region45: #{tpu_custom_call.1} parent=11 // pred_check
          %p326 = pneg %p233
        $region46: #{tpu_custom_call.1} parent=11 // pred_check_branch
          %328 = sbr.rel (%p326) target = $region48
        $region47: #{tpu_custom_call.1} parent=11 // pred_region
          _
        $region48: #{tpu_custom_call.1} parent=11 // pred_fallthru
          _
        // Predicated region
        $region49: #{tpu_custom_call.1} parent=11 // pred_check
          %p329 = pneg %p254
        $region50: #{tpu_custom_call.1} parent=11 // pred_check_branch
          %331 = sbr.rel (%p329) target = $region52
        $region51: #{tpu_custom_call.1} parent=11 // pred_region
          _
        $region52: #{tpu_custom_call.1} parent=11 // pred_fallthru
          _
      $region12: #{tpu_custom_call.1} parent=5 // pred_fallthru
        _
      %p332 = scmp.lt.s32.totalorder %s18, 2
      // Predicated region
      $region53: #{tpu_custom_call.1} parent=5 // pred_check
        %p333 = pneg %p332
      $region54: #{tpu_custom_call.1} parent=5 // pred_check_branch
        %335 = sbr.rel (%p333) target = $region56
      $region55: #{tpu_custom_call.1} parent=5 // pred_region
        // Predicated region
        $region57: #{tpu_custom_call.1} parent=55 // pred_check
          %p336 = pneg %p59
        $region58: #{tpu_custom_call.1} parent=55 // pred_check_branch
          %338 = sbr.rel (%p336) target = $region60
        $region59: #{tpu_custom_call.1} parent=55 // pred_region
          %p339 = scmp.lt.s32.totalorder %s18, 1
          %s340 = scalar_select %p339, %s18, 1
          %s341 = smul.addr %s340, 2
          %s342 = smul.addr %s341, 4
          %s343 = scalar_lea.vmem %s1, %s342
        $region60: #{tpu_custom_call.1} parent=55 // pred_fallthru
          _
      $region56: #{tpu_custom_call.1} parent=5 // pred_fallthru
        _
      %p344 = scmp.le.s32.totalorder 1, %s18
      %p345 = scmp.lt.s32.totalorder %s18, 3
      %p346 = pnand %p344, %p345
      %p347 = pneg %p346
      // Predicated region
      $region61: #{tpu_custom_call.1} parent=5 // pred_check
        _
      $region62: #{tpu_custom_call.1} parent=5 // pred_check_branch
        %349 = sbr.rel (%p346) target = $region64
      $region63: #{tpu_custom_call.1} parent=5 // pred_region
        %s350 = ssub.s32 %s18, 1
        // Predicated region
        $region65: #{tpu_custom_call.1} parent=63 // pred_check
          %p351 = pneg %p39
        $region66: #{tpu_custom_call.1} parent=63 // pred_check_branch
          %353 = sbr.rel (%p351) target = $region68
        $region67: #{tpu_custom_call.1} parent=63 // pred_region
          %355 = dma.done [#allocation5], 16
        $region68: #{tpu_custom_call.1} parent=63 // pred_fallthru
          _
        %356 = sfence
        %p357 = pneg %p39
        %p358 = pneg %p36
        %p359 = scmp.lt.s32.totalorder %s23, 1
        %s360 = scalar_select %p359, %s23, 1
        %s361 = smul.addr %s360, 2
        %s362 = smul.addr %s361, 4
        %s363 = scalar_lea.vmem %s1, %s362
        %p364 = pneg %p65
        %p365 = pneg %p62
        %p366 = pneg %p86
        %p367 = pneg %p83
        %p368 = pneg %p107
        %p369 = pneg %p104
        %p370 = pneg %p128
        %p371 = pneg %p125
        %p372 = pneg %p149
        %p373 = pneg %p146
        %p374 = pneg %p170
        %p375 = pneg %p167
        %p376 = pneg %p191
        %p377 = pneg %p188
        %p378 = pneg %p212
        %p379 = pneg %p209
        %p380 = pneg %p233
        %p381 = pneg %p230
        %p382 = pneg %p254
        %p383 = pneg %p251
        %p384 = pneg %p280
        %p385 = pneg %p277
        %p386 = scmp.lt.s32.totalorder %s23, 1
        %s387 = scalar_select %p386, %s23, 1
        %s388 = smul.addr %s387, 2
        %s389 = smul.addr %s388, 4
        %s390 = scalar_lea.vmem %s11, %s389
        %p391 = scmp.lt.s32.totalorder %s23, 1
        %s392 = scalar_select %p391, %s23, 1
        %s393 = smul.addr %s392, 2
        %s394 = smul.addr %s393, 4
        %s395 = scalar_lea.vmem %s1, %s394
        %p396 = scmp.lt.s32.totalorder %s23, 1
        %s397 = scalar_select %p396, %s23, 1
        %s398 = smul.addr %s397, 2
        %s399 = smul.addr %s398, 4
        %s400 = scalar_lea.vmem %s11, %s399
        %s402 = sld [smem:[#allocation4]]
        %s403 = sld [smem:[#allocation4 + $0x1]]
        %s404 = sld [smem:[#allocation4 + $0x2]]
        %s405 = sld [smem:[#allocation4 + $0x3]]
        %s406 = sld [smem:[#allocation4 + $0x4]]
        %s407 = sld [smem:[#allocation4 + $0x5]]
        %vm408 = vcmask 1043456
        %vm409 = vcmask 7172
        %vm410 = vmor %vm409, %vm408
        %411 = vst.msk [vmem:[#allocation2] sm:$0xff] %vm410, 0
        %412 = vst.msk [vmem:[#allocation2 + $0x10] sm:$0xff] %vm410, 0
        %vm413 = vcmask 1040384
        %vm414 = vcmask 4100
        %vm415 = vmor %vm414, %vm413
        %416 = vst.msk [vmem:[#allocation2 + $0x20] sm:$0x11] %vm415, 0
        %vm417 = vcmask 1044472
        %vm418 = vcmask 1047556
        %vm419 = vmor %vm418, %vm417
        %420 = vst.msk [vmem:[#allocation2 + $0x8] sm:$0xff] %vm419, 0
        %421 = vst.msk [vmem:[#allocation2 + $0x18] sm:$0xff] %vm419, 0
        %vm422 = vcmask 1041400
        %vm423 = vcmask 1044484
        %vm424 = vmor %vm423, %vm422
        %425 = vst.msk [vmem:[#allocation2 + $0x28] sm:$0x11] %vm424, 0
        %426 = vst.msk [vmem:[#allocation3] sm:$0xff] %vm410, 0
        %427 = vst.msk [vmem:[#allocation3 + $0x10] sm:$0xff] %vm410, 0
        %428 = vst.msk [vmem:[#allocation3 + $0x20] sm:$0xff] %vm410, 0
        %429 = vst.msk [vmem:[#allocation3 + $0x30] sm:$0xff] %vm410, 0
        %430 = vst.msk [vmem:[#allocation3 + $0x40] sm:$0xff] %vm410, 0
        %431 = vst.msk [vmem:[#allocation3 + $0x50] sm:$0xff] %vm410, 0
        %432 = vst.msk [vmem:[#allocation3 + $0x60] sm:$0xff] %vm410, 0
        %433 = vst.msk [vmem:[#allocation3 + $0x70] sm:$0xff] %vm410, 0
        %434 = vst.msk [vmem:[#allocation3 + $0x80] sm:$0xff] %vm410, 0
        %435 = vst.msk [vmem:[#allocation3 + $0x90] sm:$0xff] %vm410, 0
        %436 = vst.msk [vmem:[#allocation3 + $0xa0] sm:$0xff] %vm410, 0
        %437 = vst.msk [vmem:[#allocation3 + $0xb0] sm:$0xff] %vm410, 0
        %438 = vst.msk [vmem:[#allocation3 + $0x8] sm:$0xff] %vm419, 0
        %439 = vst.msk [vmem:[#allocation3 + $0x18] sm:$0xff] %vm419, 0
        %440 = vst.msk [vmem:[#allocation3 + $0x28] sm:$0xff] %vm419, 0
        %441 = vst.msk [vmem:[#allocation3 + $0x38] sm:$0xff] %vm419, 0
        %442 = vst.msk [vmem:[#allocation3 + $0x48] sm:$0xff] %vm419, 0
        %443 = vst.msk [vmem:[#allocation3 + $0x58] sm:$0xff] %vm419, 0
        %444 = vst.msk [vmem:[#allocation3 + $0x68] sm:$0xff] %vm419, 0
        %445 = vst.msk [vmem:[#allocation3 + $0x78] sm:$0xff] %vm419, 0
        %446 = vst.msk [vmem:[#allocation3 + $0x88] sm:$0xff] %vm419, 0
        %447 = vst.msk [vmem:[#allocation3 + $0x98] sm:$0xff] %vm419, 0
        %448 = vst.msk [vmem:[#allocation3 + $0xa8] sm:$0xff] %vm419, 0
        %449 = vst.msk [vmem:[#allocation3 + $0xb8] sm:$0xff] %vm419, 0
        %v450 = vld [vmem:[%s395] sm:$0x77]
        %v451 = vld [vmem:[%s2] sm:$0x7]
        %453 = vset.pattern.permute.xlu0 0
        %454 = vperm.xlu0 %453, %v451
        %v455 = vpop.permute.xlu0 %454
        %v458 = vperm.slane %v450, 0
        %v459 = vperm.slane %v450, 4
        %v462 = vperm.slane %v458, 0
        %v463 = vperm.slane %v459, 0
        %v464 = vmul.f32 %v455, %v462
        %v465 = vmul.f32 %v455, %v463
        %466 = vset.pattern.permute.xlu0 1
        %467 = vperm.xlu0 %466, %v451
        %v468 = vpop.permute.xlu0 %467
        %v470 = vperm.slane %v450, 1
        %v471 = vperm.slane %v450, 5
        %v474 = vperm.slane %v470, 1
        %v475 = vperm.slane %v471, 1
        %v476 = vmul.f32 %v468, %v474
        %v477 = vmul.f32 %v468, %v475
        %v478 = vadd.f32 %v464, %v476
        %v479 = vadd.f32 %v465, %v477
        %480 = vset.pattern.permute.xlu0 2
        %481 = vperm.xlu0 %480, %v451
        %v482 = vpop.permute.xlu0 %481
        %v484 = vperm.slane %v450, 2
        %v485 = vperm.slane %v450, 6
        %v488 = vperm.slane %v484, 2
        %v489 = vperm.slane %v485, 2
        %v490 = vmul.f32 %v482, %v488
        %v491 = vmul.f32 %v482, %v489
        %v492 = vadd.f32 %v478, %v490
        %v493 = vadd.f32 %v479, %v491
        %v494 = vld [vmem:[%s3] sm:$0x7]
        %496 = vset.pattern.permute.xlu0 0
        %497 = vperm.xlu0 %496, %v494
        %v498 = vpop.permute.xlu0 %497
        %v500 = vadd.f32 %v492, %v498
        %v501 = vadd.f32 %v493, %v498
        %v502 = vsub.f32 1.0, %v500
        %v503 = vsub.f32 1.0, %v501
        %v504 = vmax.f32 %v502, 0.0
        %v505 = vmax.f32 %v503, 0.0
        %v506 = vmin.f32 %v504, 1.0
        %v507 = vmin.f32 %v505, 1.0
        %v508 = vmul.f32 %v506, %v506
        %v509 = vmul.f32 %v507, %v507
        %v510 = vstv %s402
        %v511 = vmul.f32 %v510, %v508
        %v512 = vmul.f32 %v510, %v509
        %v513 = vmul.f32 %v511, %v502
        %v514 = vmul.f32 %v512, %v503
        %v515 = vadd.f32 %v500, %v513
        %v516 = vadd.f32 %v501, %v514
        %v517 = vmax.f32 %v515, 1e-07
        %v518 = vmax.f32 %v516, 1e-07
        %v519 = vmin.f32 %v517, 1.0
        %v520 = vmin.f32 %v518, 1.0
        %v521 = vlog2.pop %v519
        %v522 = vmul.f32 %v521, 0.6931472
        %v523 = vlog2.pop %v520
        %v524 = vmul.f32 %v523, 0.6931472
        %v525 = vstv %s403
        %v526 = vmul.f32 %v525, %v522
        %v527 = vmul.f32 %v525, %v524
        %v528 = vmul.f32 %v526, 1.442695
        %v529 = vpow.pop %v528
        %v530 = vmul.f32 %v527, 1.442695
        %v531 = vpow.pop %v530
        %v532 = vmax.f32 %v529, 0.0
        %v533 = vmax.f32 %v531, 0.0
        %v534 = vmin.f32 %v532, 1.0
        %v535 = vmin.f32 %v533, 1.0
        %v536 = vmul.f32 %v534, %v534
        %v537 = vmul.f32 %v535, %v535
        %s538 = ssub.f32 1.0, %s404
        %v539 = vstv %s538
        %v540 = vmul.f32 %v536, %v539
        %v541 = vmul.f32 %v537, %v539
        %v542 = vsub.f32 1.0, %v540
        %v543 = vsub.f32 1.0, %v541
        %v544 = vmul.f32 %v529, %v542
        %v545 = vmul.f32 %v531, %v543
        %v546 = vmax.f32 %v544, 0.0
        %v547 = vmax.f32 %v545, 0.0
        %v548 = vmin.f32 %v546, 1.0
        %v549 = vmin.f32 %v547, 1.0
        %v550 = vmax.f32 %v548, 1e-07
        %v551 = vmax.f32 %v549, 1e-07
        %v552 = vmin.f32 %v550, 1.0
        %v553 = vmin.f32 %v551, 1.0
        %v554 = vlog2.pop %v552
        %v555 = vmul.f32 %v554, 0.6931472
        %v556 = vlog2.pop %v553
        %v557 = vmul.f32 %v556, 0.6931472
        %v558 = vstv %s405
        %v559 = vmul.f32 %v558, %v555
        %v560 = vmul.f32 %v558, %v557
        %v561 = vmul.f32 %v559, 1.442695
        %v562 = vpow.pop %v561
        %v563 = vmul.f32 %v560, 1.442695
        %v564 = vpow.pop %v563
        %v565 = vmul.f32 %v562, 0.299
        %v566 = vmul.f32 %v564, 0.299
        %v567 = vmul.f32 %v562, 0.587
        %v568 = vmul.f32 %v564, 0.587
        %v571 = vrot.slane %v567, 1
        %v572 = vrot.slane %v568, 1
        %v575 = vadd.f32 %v565, %v571
        %v576 = vadd.f32 %v566, %v572
        %v577 = vmul.f32 %v562, 0.114
        %v578 = vmul.f32 %v564, 0.114
        %v581 = vrot.slane %v577, 2
        %v582 = vrot.slane %v578, 2
        %v585 = vadd.f32 %v575, %v581
        %v586 = vadd.f32 %v576, %v582
        %v587 = vperm.slane %v585, 0
        %v588 = vperm.slane %v586, 0
        %v589 = vsub.f32 %v562, %v587
        %v590 = vsub.f32 %v564, %v588
        %v591 = vstv %s406
        %v592 = vmul.f32 %v591, %v589
        %v593 = vmul.f32 %v591, %v590
        %v594 = vadd.f32 %v587, %v592
        %v595 = vadd.f32 %v588, %v593
        %v596 = vld [vmem:[%s4] sm:$0x7]
        %598 = vset.pattern.permute.xlu0 0
        %599 = vperm.xlu0 %598, %v596
        %v600 = vpop.permute.xlu0 %599
        %v602 = vmul.f32 %v594, %v600
        %v603 = vmul.f32 %v595, %v600
        %v604 = vmax.f32 %v602, 0.0
        %v605 = vmax.f32 %v603, 0.0
        %v606 = vmin.f32 %v604, 1.0
        %v607 = vmin.f32 %v605, 1.0
        %v610 = vrot.slane %v607, 4
        %v611 = vsel %vm408, %v606, %v610
        %613 = vst [vmem:[%s400] sm:$0x77] %v611
        %v614 = vlaneseq
        %v615 = vand.u32 %v614, 127
        %v616 = vadd.s32 %v615, 128
        %vm617 = vcmp.lt.s32.totalorder %v615, 0
        %v618 = vsub.s32 0, %v615
        %v619 = vsel %vm617, %v618, %v615
        %v620 = vshrl.u32 %v619, 4
        %v621 = vand.u32 %v619, 15
        %v622 = vsub.s32 0, %v621
        %v623 = vsel %vm617, %v622, %v621
        %vm624 = vcmp.lt.s32.totalorder %v616, 0
        %v625 = vsub.s32 0, %v616
        %v626 = vsel %vm624, %v625, %v616
        %v627 = vshrl.u32 %v626, 4
        %v628 = vand.u32 %v626, 15
        %v629 = vsub.s32 0, %v628
        %v630 = vsel %vm624, %v629, %v628
        %vm631 = vcmp.ne.s32.totalorder %v623, 0
        %vm632 = vcmp.ne.s32.totalorder %v630, 0
        %vm633 = vcmp.lt.s32.totalorder %v623, 0
        %vm634 = vcmp.lt.s32.totalorder %v630, 0
        %vm635 = vmand %vm633, %vm631
        %vm636 = vmand %vm634, %vm632
        %v637 = vadd.s32 %v623, 16
        %v638 = vadd.s32 %v630, 16
        %v639 = vsel %vm635, %v637, %v623
        %v640 = vsel %vm636, %v638, %v630
        %vm641 = vcmp.ne.s32.totalorder %v639, 0
        %vm642 = vcmp.ne.s32.totalorder %v640, 0
        %vm643 = vcmp.ne.s32.totalorder %v639, 15
        %vm644 = vcmp.ne.s32.totalorder %v640, 15
        %645 = vst [vmem:[#allocation1] ss:$2 sm:$0xff] %v450
        %v646 = vld.sshfl [vmem:[#allocation1] sm:$0xff pattern:$0x75316420]
        %v647 = vld.sshfl [vmem:[#allocation1 + $0x8] sm:$0xff pattern:$0x75316420]
        %v650 = vrot.slane %v606, 5
        %v651 = vrot.slane %v607, 5
        %vm654 = vcmask 1042432
        %v655 = vsel %vm654, %v646, %v650
        %v656 = vsel %vm654, %v647, %v651
        %v657 = vpack.c.bf16 %v656, %v655
        %v658 = vsel %vm643, 1, 0
        %v659 = vsel %vm644, 1, 0
        %vm660 = vcmp.eq.s32.totalorder %v658, 1
        %vm661 = vcmp.eq.s32.totalorder %v659, 1
        %vm662 = vmpackc.low %vm661, %vm660
        %v663 = vsel %vm662, %v657, 0
        %665 = vrot.lane.b32.xlu0 %v663, 1
        %v666 = vpop.permute.xlu0 %665
        %v667 = vrot.slane %v666, 4
        %vm668 = vcmask 7168
        %v669 = vsel %vm668, %v667, %v666
        %vm672 = vcmask 1042440
        %vm673 = vcmask 1046532
        %vm674 = vmor %vm673, %vm672
        %675 = vst.msk [vmem:[#allocation2 + $0x4] sm:$0x77] %vm674, %v669
        %vm676 = vcmask 2048
        %677 = vst.msk [vmem:[#allocation2 + $0xc] sm:$0x7] %vm676, %v667
        %v679 = vrot.slane %v657, 5
        %v680 = vrot.slane %v679, 4
        %683 = vst [vmem:[#allocation2 + $0x4] sm:$0x88] %v679
        %684 = vst [vmem:[#allocation2 + $0x14] sm:$0x33] %v680
        %v685 = vsel %vm641, 1, 0
        %v686 = vsel %vm642, 1, 0
        %vm687 = vcmp.eq.s32.totalorder %v685, 1
        %vm688 = vcmp.eq.s32.totalorder %v686, 1
        %vm689 = vmpackc.low %vm688, %vm687
        %v690 = vsel %vm689, %v657, 0
        %v692 = vrot.slane %v690, 6
        %v693 = vrot.slane %v692, 4
        %694 = vrot.lane.b32.xlu0 %v692, 127
        %v695 = vpop.permute.xlu0 %694
        %696 = vrot.lane.b32.xlu0 %v693, 127
        %v697 = vpop.permute.xlu0 %696
        %v698 = vrot.slane %v695, 4
        %v699 = vrot.slane %v697, 4
        %vm700 = vcmask 1039360
        %v701 = vsel %vm700, %v698, %v695
        %v702 = vsel %vm700, %v699, %v697
        %vm707 = vcmask 1044474
        %vm708 = vcmask 1047558
        %vm709 = vmor %vm708, %vm707
        %710 = vst.msk [vmem:[#allocation2 + $0x10] sm:$0xcc] %vm709, %v701
        %vm711 = vcmask 1035266
        %712 = vst.msk [vmem:[#allocation2 + $0x18] sm:$0xc] %vm711, %v698
        %713 = vst.msk [vmem:[#allocation2 + $0x20] sm:$0x11] %vm424, %v702
        %vm714 = vcmask 1032192
        %715 = vst.msk [vmem:[#allocation2 + $0x28] sm:$0x1] %vm714, %v699
        %v716 = vld [vmem:[%s5] sm:$0xf]
        %v717 = vld [vmem:[%s5 + $0x4] sm:$0xf]
        %v718 = vld [vmem:[%s5 + $0x8] sm:$0xf]
        %v719 = vld [vmem:[%s5 + $0xc] sm:$0xf]
        %v720 = vld [vmem:[#allocation2] sm:$0xff]
        %v721 = vld [vmem:[#allocation2 + $0x8] sm:$0xf]
        %v722 = vld [vmem:[#allocation2 + $0x10] sm:$0xff]
        %v723 = vld [vmem:[#allocation2 + $0x18] sm:$0xf]
        %v724 = vld [vmem:[#allocation2 + $0x20] sm:$0x11]
        %v725 = vld [vmem:[#allocation2 + $0x28] sm:$0x1]
        %s726 = scalar_lea.vmem %s5, 16
        %v727 = vld [vmem:[%s726] sm:$0xf]
        %v728 = vld [vmem:[%s726 + $0x4] sm:$0xf]
        %v729 = vld [vmem:[%s726 + $0x8] sm:$0xf]
        %v730 = vld [vmem:[%s726 + $0xc] sm:$0xf]
        %v731 = vld [vmem:[#allocation2 + $0x4] sm:$0xff]
        %v732 = vld [vmem:[#allocation2 + $0x14] sm:$0xff]
        %v733 = vld [vmem:[#allocation2 + $0x24] sm:$0x11]
        %v738 = vunpack.c.l.b16 %v727
        %v739 = vunpack.c.l.b16 %v728
        %v740 = vunpack.c.l.b16 %v729
        %v741 = vunpack.c.l.b16 %v730
        %v742 = vpack.c.b16 %v739, %v738
        %v743 = vpack.c.b16 %v741, %v740
        %v747 = vunpack.c.l.b16 %v731
        %v748 = vunpack.c.h.b16 %v731
        %v749 = vunpack.c.l.b16 %v732
        %v750 = vunpack.c.h.b16 %v732
        %v751 = vunpack.c.l.b16 %v733
        %v752 = vunpack.c.h.b16 %v733
        %v753 = vpack.c.b16 %v749, %v747
        %v754 = vpack.c.b16 %v750, %v748
        %v755 = vpack.c.b16 %v751, %v751
        %v756 = vpack.c.b16 %v752, %v752
        %vm759 = vcmask 146432
        %v761 = vsel %vm759, %v742, 0
        %v764 = vsel %vm759, %v743, 0
        %v767 = vsel %vm413, %v755, 0
        %v770 = vsel %vm413, %v756, 0
        %772 = vmatpush.bf16.msra.mxu0 0
        %773 = vmatpush.bf16.msra.mxu0 0
        %774 = vmatpush.bf16.msra.mxu0 0
        %775 = vmatpush.bf16.msra.mxu0 0
        %776 = vmatpush.bf16.msra.mxu0 0
        %777 = vmatpush.bf16.msra.mxu0 0
        %778 = vmatpush.bf16.msra.mxu0 %v767
        %779 = vmatpush.bf16.msra.mxu0 %v753
        %780 = vmatmul.bf16.gmra.mxu0 %v761
        %v781 = vpop.f32.mrf.mxu0
        %v782 = vadd.f32 0.0, %v781
        %v783 = vpop.f32.mrf.mxu0
        %v784 = vadd.f32 0.0, %v783
        %785 = vmatmul.bf16.gmra.mxu0 %v764
        %v786 = vpop.f32.mrf.mxu0
        %v787 = vadd.f32 0.0, %v786
        %v788 = vpop.f32.mrf.mxu0
        %v789 = vadd.f32 0.0, %v788
        %790 = vdwg.mxu0
        %791 = vmatpush.bf16.msra.mxu0 0
        %792 = vmatpush.bf16.msra.mxu0 0
        %793 = vmatpush.bf16.msra.mxu0 0
        %794 = vmatpush.bf16.msra.mxu0 0
        %795 = vmatpush.bf16.msra.mxu0 0
        %796 = vmatpush.bf16.msra.mxu0 0
        %797 = vmatpush.bf16.msra.mxu0 %v770
        %798 = vmatpush.bf16.msra.mxu0 %v754
        %799 = vmatmul.bf16.gmra.mxu0 %v761
        %v800 = vpop.f32.mrf.mxu0
        %v801 = vadd.f32 0.0, %v800
        %v802 = vpop.f32.mrf.mxu0
        %v803 = vadd.f32 0.0, %v802
        %804 = vmatmul.bf16.gmra.mxu0 %v764
        %v805 = vpop.f32.mrf.mxu0
        %v806 = vadd.f32 0.0, %v805
        %v807 = vpop.f32.mrf.mxu0
        %v808 = vadd.f32 0.0, %v807
        %809 = vdwg.mxu0
        %v814 = vunpack.c.l.b16 %v716
        %v815 = vunpack.c.l.b16 %v717
        %v816 = vunpack.c.l.b16 %v718
        %v817 = vunpack.c.l.b16 %v719
        %v818 = vpack.c.b16 %v815, %v814
        %v819 = vpack.c.b16 %v817, %v816
        %v826 = vunpack.c.l.b16 %v720
        %v827 = vunpack.c.h.b16 %v720
        %v828 = vunpack.c.l.b16 %v721
        %v829 = vunpack.c.l.b16 %v722
        %v830 = vunpack.c.h.b16 %v722
        %v831 = vunpack.c.l.b16 %v723
        %v832 = vunpack.c.l.b16 %v724
        %v833 = vunpack.c.h.b16 %v724
        %v834 = vunpack.c.l.b16 %v725
        %v835 = vpack.c.b16 %v829, %v826
        %v836 = vpack.c.b16 %v830, %v827
        %v837 = vpack.c.b16 %v831, %v828
        %v838 = vpack.c.b16 %v832, %v832
        %v839 = vpack.c.b16 %v833, %v833
        %v840 = vpack.c.b16 %v834, %v834
        %841 = vrot.lane.b32.xlu0 %v835, 16
        %v842 = vpop.permute.xlu0 %841
        %843 = vrot.lane.b32.xlu0 %v836, 16
        %v844 = vpop.permute.xlu0 %843
        %845 = vrot.lane.b32.xlu0 %v837, 16
        %v846 = vpop.permute.xlu0 %845
        %847 = vrot.lane.b32.xlu0 %v838, 16
        %v848 = vpop.permute.xlu0 %847
        %849 = vrot.lane.b32.xlu0 %v839, 16
        %v850 = vpop.permute.xlu0 %849
        %851 = vrot.lane.b32.xlu0 %v840, 16
        %v852 = vpop.permute.xlu0 %851
        %vm853 = vcmask 130048
        %v854 = vsel %vm853, %v842, %v844
        %v855 = vsel %vm853, %v844, %v846
        %v856 = vsel %vm853, %v848, %v850
        %v857 = vsel %vm853, %v850, %v852
        %v861 = vsel %vm759, %v818, 0
        %v864 = vsel %vm759, %v819, 0
        %v867 = vsel %vm413, %v856, 0
        %v870 = vsel %vm413, %v857, 0
        %872 = vmatpush.bf16.msra.mxu0 0
        %873 = vmatpush.bf16.msra.mxu0 0
        %874 = vmatpush.bf16.msra.mxu0 0
        %875 = vmatpush.bf16.msra.mxu0 0
        %876 = vmatpush.bf16.msra.mxu0 0
        %877 = vmatpush.bf16.msra.mxu0 0
        %878 = vmatpush.bf16.msra.mxu0 %v867
        %879 = vmatpush.bf16.msra.mxu0 %v854
        %880 = vmatmul.bf16.gmra.mxu0 %v861
        %v881 = vpop.f32.mrf.mxu0
        %v882 = vadd.f32 %v782, %v881
        %v883 = vpop.f32.mrf.mxu0
        %v884 = vadd.f32 %v784, %v883
        %885 = vmatmul.bf16.gmra.mxu0 %v864
        %v886 = vpop.f32.mrf.mxu0
        %v887 = vadd.f32 %v787, %v886
        %v888 = vpop.f32.mrf.mxu0
        %v889 = vadd.f32 %v789, %v888
        %890 = vdwg.mxu0
        %891 = vmatpush.bf16.msra.mxu0 0
        %892 = vmatpush.bf16.msra.mxu0 0
        %893 = vmatpush.bf16.msra.mxu0 0
        %894 = vmatpush.bf16.msra.mxu0 0
        %895 = vmatpush.bf16.msra.mxu0 0
        %896 = vmatpush.bf16.msra.mxu0 0
        %897 = vmatpush.bf16.msra.mxu0 %v870
        %898 = vmatpush.bf16.msra.mxu0 %v855
        %899 = vmatmul.bf16.gmra.mxu0 %v861
        %v900 = vpop.f32.mrf.mxu0
        %v901 = vadd.f32 %v801, %v900
        %v902 = vpop.f32.mrf.mxu0
        %v903 = vadd.f32 %v803, %v902
        %904 = vmatmul.bf16.gmra.mxu0 %v864
        %v905 = vpop.f32.mrf.mxu0
        %v906 = vadd.f32 %v806, %v905
        %v907 = vpop.f32.mrf.mxu0
        %v908 = vadd.f32 %v808, %v907
        %909 = vdwg.mxu0
        %s910 = scalar_lea.vmem %s5, 32
        %v911 = vld [vmem:[%s910] sm:$0xf]
        %v912 = vld [vmem:[%s910 + $0x4] sm:$0xf]
        %v913 = vld [vmem:[%s910 + $0x8] sm:$0xf]
        %v914 = vld [vmem:[%s910 + $0xc] sm:$0xf]
        %v915 = vld [vmem:[#allocation2 + $0x4] sm:$0xff]
        %v916 = vld [vmem:[#allocation2 + $0xc] sm:$0xf]
        %v917 = vld [vmem:[#allocation2 + $0x14] sm:$0xff]
        %v918 = vld [vmem:[#allocation2 + $0x1c] sm:$0xf]
        %v919 = vld [vmem:[#allocation2 + $0x24] sm:$0x11]
        %v920 = vld [vmem:[#allocation2 + $0x2c] sm:$0x1]
        %v925 = vunpack.c.l.b16 %v911
        %v926 = vunpack.c.l.b16 %v912
        %v927 = vunpack.c.l.b16 %v913
        %v928 = vunpack.c.l.b16 %v914
        %v929 = vpack.c.b16 %v926, %v925
        %v930 = vpack.c.b16 %v928, %v927
        %v937 = vunpack.c.l.b16 %v915
        %v938 = vunpack.c.h.b16 %v915
        %v939 = vunpack.c.l.b16 %v916
        %v940 = vunpack.c.l.b16 %v917
        %v941 = vunpack.c.h.b16 %v917
        %v942 = vunpack.c.l.b16 %v918
        %v943 = vunpack.c.l.b16 %v919
        %v944 = vunpack.c.h.b16 %v919
        %v945 = vunpack.c.l.b16 %v920
        %v946 = vpack.c.b16 %v940, %v937
        %v947 = vpack.c.b16 %v941, %v938
        %v948 = vpack.c.b16 %v942, %v939
        %v949 = vpack.c.b16 %v943, %v943
        %v950 = vpack.c.b16 %v944, %v944
        %v951 = vpack.c.b16 %v945, %v945
        %952 = vrot.lane.b32.xlu0 %v946, 112
        %v953 = vpop.permute.xlu0 %952
        %954 = vrot.lane.b32.xlu0 %v947, 112
        %v955 = vpop.permute.xlu0 %954
        %956 = vrot.lane.b32.xlu0 %v948, 112
        %v957 = vpop.permute.xlu0 %956
        %958 = vrot.lane.b32.xlu0 %v949, 112
        %v959 = vpop.permute.xlu0 %958
        %960 = vrot.lane.b32.xlu0 %v950, 112
        %v961 = vpop.permute.xlu0 %960
        %962 = vrot.lane.b32.xlu0 %v951, 112
        %v963 = vpop.permute.xlu0 %962
        %vm964 = vcmask 916480
        %v965 = vsel %vm964, %v953, %v955
        %v966 = vsel %vm964, %v955, %v957
        %v967 = vsel %vm964, %v959, %v961
        %v968 = vsel %vm964, %v961, %v963
        %v972 = vsel %vm759, %v929, 0
        %v975 = vsel %vm759, %v930, 0
        %v978 = vsel %vm413, %v967, 0
        %v981 = vsel %vm413, %v968, 0
        %983 = vmatpush.bf16.msra.mxu0 0
        %984 = vmatpush.bf16.msra.mxu0 0
        %985 = vmatpush.bf16.msra.mxu0 0
        %986 = vmatpush.bf16.msra.mxu0 0
        %987 = vmatpush.bf16.msra.mxu0 0
        %988 = vmatpush.bf16.msra.mxu0 0
        %989 = vmatpush.bf16.msra.mxu0 %v978
        %990 = vmatpush.bf16.msra.mxu0 %v965
        %991 = vmatmul.bf16.gmra.mxu0 %v972
        %v992 = vpop.f32.mrf.mxu0
        %v993 = vadd.f32 0.0, %v992
        %v994 = vpop.f32.mrf.mxu0
        %v995 = vadd.f32 0.0, %v994
        %996 = vmatmul.bf16.gmra.mxu0 %v975
        %v997 = vpop.f32.mrf.mxu0
        %v998 = vadd.f32 0.0, %v997
        %v999 = vpop.f32.mrf.mxu0
        %v1000 = vadd.f32 0.0, %v999
        %1001 = vdwg.mxu0
        %1002 = vmatpush.bf16.msra.mxu0 0
        %1003 = vmatpush.bf16.msra.mxu0 0
        %1004 = vmatpush.bf16.msra.mxu0 0
        %1005 = vmatpush.bf16.msra.mxu0 0
        %1006 = vmatpush.bf16.msra.mxu0 0
        %1007 = vmatpush.bf16.msra.mxu0 0
        %1008 = vmatpush.bf16.msra.mxu0 %v981
        %1009 = vmatpush.bf16.msra.mxu0 %v966
        %1010 = vmatmul.bf16.gmra.mxu0 %v972
        %v1011 = vpop.f32.mrf.mxu0
        %v1012 = vadd.f32 0.0, %v1011
        %v1013 = vpop.f32.mrf.mxu0
        %v1014 = vadd.f32 0.0, %v1013
        %1015 = vmatmul.bf16.gmra.mxu0 %v975
        %v1016 = vpop.f32.mrf.mxu0
        %v1017 = vadd.f32 0.0, %v1016
        %v1018 = vpop.f32.mrf.mxu0
        %v1019 = vadd.f32 0.0, %v1018
        %1020 = vdwg.mxu0
        %v1021 = vadd.f32 %v882, %v993
        %v1022 = vadd.f32 %v901, %v1012
        %v1023 = vadd.f32 %v884, %v995
        %v1024 = vadd.f32 %v903, %v1014
        %v1025 = vadd.f32 %v887, %v998
        %v1026 = vadd.f32 %v906, %v1017
        %v1027 = vadd.f32 %v889, %v1000
        %v1028 = vadd.f32 %v908, %v1019
        %v1029 = vld [vmem:[%s6] sm:$0xff]
        %v1030 = vld [vmem:[%s6 + $0x8] sm:$0xff]
        %v1031 = vld [vmem:[%s6 + $0x10] sm:$0xff]
        %v1032 = vld [vmem:[%s6 + $0x18] sm:$0xff]
        %1034 = vset.pattern.permute.xlu0 0
        %1035 = vperm.xlu0 %1034, %v1029
        %v1036 = vpop.permute.xlu0 %1035
        %1039 = vset.pattern.permute.xlu0 0
        %1040 = vperm.xlu0 %1039, %v1030
        %v1041 = vpop.permute.xlu0 %1040
        %1044 = vset.pattern.permute.xlu0 0
        %1045 = vperm.xlu0 %1044, %v1031
        %v1046 = vpop.permute.xlu0 %1045
        %1049 = vset.pattern.permute.xlu0 0
        %1050 = vperm.xlu0 %1049, %v1032
        %v1051 = vpop.permute.xlu0 %1050
        %v1053 = vadd.f32 %v1021, %v1036
        %v1054 = vadd.f32 %v1022, %v1036
        %v1055 = vadd.f32 %v1023, %v1041
        %v1056 = vadd.f32 %v1024, %v1041
        %v1057 = vadd.f32 %v1025, %v1046
        %v1058 = vadd.f32 %v1026, %v1046
        %v1059 = vadd.f32 %v1027, %v1051
        %v1060 = vadd.f32 %v1028, %v1051
        %v1061 = vmax.f32 %v1053, 0.0
        %v1062 = vmax.f32 %v1054, 0.0
        %v1063 = vmax.f32 %v1055, 0.0
        %v1064 = vmax.f32 %v1056, 0.0
        %v1065 = vmax.f32 %v1057, 0.0
        %v1066 = vmax.f32 %v1058, 0.0
        %v1067 = vmax.f32 %v1059, 0.0
        %v1068 = vmax.f32 %v1060, 0.0
        %v1069 = vpack.c.bf16 %v1062, %v1061
        %v1070 = vpack.c.bf16 %v1064, %v1063
        %v1071 = vpack.c.bf16 %v1066, %v1065
        %v1072 = vpack.c.bf16 %v1068, %v1067
        %v1073 = vsel %vm662, %v1069, 0
        %v1074 = vsel %vm662, %v1070, 0
        %v1075 = vsel %vm662, %v1071, 0
        %v1076 = vsel %vm662, %v1072, 0
        %1081 = vrot.lane.b32.xlu0 %v1073, 1
        %v1082 = vpop.permute.xlu0 %1081
        %1083 = vrot.lane.b32.xlu0 %v1074, 1
        %v1084 = vpop.permute.xlu0 %1083
        %1085 = vrot.lane.b32.xlu0 %v1075, 1
        %v1086 = vpop.permute.xlu0 %1085
        %1087 = vrot.lane.b32.xlu0 %v1076, 1
        %v1088 = vpop.permute.xlu0 %1087
        %v1089 = vrot.slane %v1082, 4
        %v1090 = vrot.slane %v1084, 4
        %v1091 = vrot.slane %v1086, 4
        %v1092 = vrot.slane %v1088, 4
        %v1093 = vsel %vm668, %v1089, %v1082
        %v1094 = vsel %vm668, %v1090, %v1084
        %v1095 = vsel %vm668, %v1091, %v1086
        %v1096 = vsel %vm668, %v1092, %v1088
        %vm1105 = vcmask 1043464
        %vm1106 = vmor %vm418, %vm1105
        %1107 = vst.msk [vmem:[#allocation3 + $0x4] sm:$0xff] %vm1106, %v1093
        %vm1108 = vcmask 3072
        %1109 = vst.msk [vmem:[#allocation3 + $0xc] sm:$0xf] %vm1108, %v1089
        %1110 = vst.msk [vmem:[#allocation3 + $0x14] sm:$0xff] %vm1106, %v1094
        %1111 = vst.msk [vmem:[#allocation3 + $0x1c] sm:$0xf] %vm1108, %v1090
        %1112 = vst.msk [vmem:[#allocation3 + $0x24] sm:$0xff] %vm1106, %v1095
        %1113 = vst.msk [vmem:[#allocation3 + $0x2c] sm:$0xf] %vm1108, %v1091
        %1114 = vst.msk [vmem:[#allocation3 + $0x34] sm:$0xff] %vm1106, %v1096
        %1115 = vst.msk [vmem:[#allocation3 + $0x3c] sm:$0xf] %vm1108, %v1092
        %1116 = vst [vmem:[#allocation3 + $0x44] sm:$0xff] %v1069
        %1117 = vst [vmem:[#allocation3 + $0x54] sm:$0xff] %v1070
        %1118 = vst [vmem:[#allocation3 + $0x64] sm:$0xff] %v1071
        %1119 = vst [vmem:[#allocation3 + $0x74] sm:$0xff] %v1072
        %v1120 = vsel %vm689, %v1069, 0
        %v1121 = vsel %vm689, %v1070, 0
        %v1122 = vsel %vm689, %v1071, 0
        %v1123 = vsel %vm689, %v1072, 0
        %1128 = vrot.lane.b32.xlu0 %v1120, 127
        %v1129 = vpop.permute.xlu0 %1128
        %1130 = vrot.lane.b32.xlu0 %v1121, 127
        %v1131 = vpop.permute.xlu0 %1130
        %1132 = vrot.lane.b32.xlu0 %v1122, 127
        %v1133 = vpop.permute.xlu0 %1132
        %1134 = vrot.lane.b32.xlu0 %v1123, 127
        %v1135 = vpop.permute.xlu0 %1134
        %v1136 = vrot.slane %v1129, 4
        %v1137 = vrot.slane %v1131, 4
        %v1138 = vrot.slane %v1133, 4
        %v1139 = vrot.slane %v1135, 4
        %v1140 = vsel %vm700, %v1136, %v1129
        %v1141 = vsel %vm700, %v1137, %v1131
        %v1142 = vsel %vm700, %v1138, %v1133
        %v1143 = vsel %vm700, %v1139, %v1135
        %1152 = vst.msk [vmem:[#allocation3 + $0x80] sm:$0xff] %vm419, %v1140
        %vm1153 = vcmask 1035264
        %1154 = vst.msk [vmem:[#allocation3 + $0x88] sm:$0xf] %vm1153, %v1136
        %1155 = vst.msk [vmem:[#allocation3 + $0x90] sm:$0xff] %vm419, %v1141
        %1156 = vst.msk [vmem:[#allocation3 + $0x98] sm:$0xf] %vm1153, %v1137
        %1157 = vst.msk [vmem:[#allocation3 + $0xa0] sm:$0xff] %vm419, %v1142
        %1158 = vst.msk [vmem:[#allocation3 + $0xa8] sm:$0xf] %vm1153, %v1138
        %1159 = vst.msk [vmem:[#allocation3 + $0xb0] sm:$0xff] %vm419, %v1143
        %1160 = vst.msk [vmem:[#allocation3 + $0xb8] sm:$0xf] %vm1153, %v1139
        %v1161 = vld [vmem:[%s7] sm:$0xf]
        %v1162 = vld [vmem:[%s7 + $0x4] sm:$0xf]
        %v1163 = vld [vmem:[%s7 + $0x8] sm:$0xf]
        %v1164 = vld [vmem:[%s7 + $0xc] sm:$0xf]
        %v1165 = vld [vmem:[#allocation3] sm:$0xff]
        %v1166 = vld [vmem:[#allocation3 + $0x8] sm:$0xf]
        %v1167 = vld [vmem:[#allocation3 + $0x10] sm:$0xff]
        %v1168 = vld [vmem:[#allocation3 + $0x18] sm:$0xf]
        %v1169 = vld [vmem:[#allocation3 + $0x20] sm:$0xff]
        %v1170 = vld [vmem:[#allocation3 + $0x28] sm:$0xf]
        %v1171 = vld [vmem:[#allocation3 + $0x30] sm:$0xff]
        %v1172 = vld [vmem:[#allocation3 + $0x38] sm:$0xf]
        %v1173 = vld [vmem:[#allocation3 + $0x40] sm:$0xff]
        %v1174 = vld [vmem:[#allocation3 + $0x48] sm:$0xf]
        %v1175 = vld [vmem:[#allocation3 + $0x50] sm:$0xff]
        %v1176 = vld [vmem:[#allocation3 + $0x58] sm:$0xf]
        %v1177 = vld [vmem:[#allocation3 + $0x60] sm:$0xff]
        %v1178 = vld [vmem:[#allocation3 + $0x68] sm:$0xf]
        %v1179 = vld [vmem:[#allocation3 + $0x70] sm:$0xff]
        %v1180 = vld [vmem:[#allocation3 + $0x78] sm:$0xf]
        %v1181 = vld [vmem:[#allocation3 + $0x80] sm:$0xff]
        %v1182 = vld [vmem:[#allocation3 + $0x88] sm:$0xf]
        %v1183 = vld [vmem:[#allocation3 + $0x90] sm:$0xff]
        %v1184 = vld [vmem:[#allocation3 + $0x98] sm:$0xf]
        %v1185 = vld [vmem:[#allocation3 + $0xa0] sm:$0xff]
        %v1186 = vld [vmem:[#allocation3 + $0xa8] sm:$0xf]
        %v1187 = vld [vmem:[#allocation3 + $0xb0] sm:$0xff]
        %v1188 = vld [vmem:[#allocation3 + $0xb8] sm:$0xf]
        %s1189 = scalar_lea.vmem %s7, 16
        %v1190 = vld [vmem:[%s1189] sm:$0xf]
        %v1191 = vld [vmem:[%s1189 + $0x4] sm:$0xf]
        %v1192 = vld [vmem:[%s1189 + $0x8] sm:$0xf]
        %v1193 = vld [vmem:[%s1189 + $0xc] sm:$0xf]
        %v1194 = vld [vmem:[#allocation3 + $0x4] sm:$0xff]
        %v1195 = vld [vmem:[#allocation3 + $0x14] sm:$0xff]
        %v1196 = vld [vmem:[#allocation3 + $0x24] sm:$0xff]
        %v1197 = vld [vmem:[#allocation3 + $0x34] sm:$0xff]
        %v1198 = vld [vmem:[#allocation3 + $0x44] sm:$0xff]
        %v1199 = vld [vmem:[#allocation3 + $0x54] sm:$0xff]
        %v1200 = vld [vmem:[#allocation3 + $0x64] sm:$0xff]
        %v1201 = vld [vmem:[#allocation3 + $0x74] sm:$0xff]
        %v1202 = vld [vmem:[#allocation3 + $0x84] sm:$0xff]
        %v1203 = vld [vmem:[#allocation3 + $0x94] sm:$0xff]
        %v1204 = vld [vmem:[#allocation3 + $0xa4] sm:$0xff]
        %v1205 = vld [vmem:[#allocation3 + $0xb4] sm:$0xff]
        %v1210 = vunpack.c.l.b16 %v1190
        %v1211 = vunpack.c.l.b16 %v1191
        %v1212 = vunpack.c.l.b16 %v1192
        %v1213 = vunpack.c.l.b16 %v1193
        %v1214 = vpack.c.b16 %v1211, %v1210
        %v1215 = vpack.c.b16 %v1213, %v1212
        %v1228 = vunpack.c.l.b16 %v1194
        %v1229 = vunpack.c.h.b16 %v1194
        %v1230 = vunpack.c.l.b16 %v1195
        %v1231 = vunpack.c.h.b16 %v1195
        %v1232 = vunpack.c.l.b16 %v1196
        %v1233 = vunpack.c.h.b16 %v1196
        %v1234 = vunpack.c.l.b16 %v1197
        %v1235 = vunpack.c.h.b16 %v1197
        %v1236 = vunpack.c.l.b16 %v1198
        %v1237 = vunpack.c.h.b16 %v1198
        %v1238 = vunpack.c.l.b16 %v1199
        %v1239 = vunpack.c.h.b16 %v1199
        %v1240 = vunpack.c.l.b16 %v1200
        %v1241 = vunpack.c.h.b16 %v1200
        %v1242 = vunpack.c.l.b16 %v1201
        %v1243 = vunpack.c.h.b16 %v1201
        %v1244 = vunpack.c.l.b16 %v1202
        %v1245 = vunpack.c.h.b16 %v1202
        %v1246 = vunpack.c.l.b16 %v1203
        %v1247 = vunpack.c.h.b16 %v1203
        %v1248 = vunpack.c.l.b16 %v1204
        %v1249 = vunpack.c.h.b16 %v1204
        %v1250 = vunpack.c.l.b16 %v1205
        %v1251 = vunpack.c.h.b16 %v1205
        %v1252 = vpack.c.b16 %v1230, %v1228
        %v1253 = vpack.c.b16 %v1231, %v1229
        %v1254 = vpack.c.b16 %v1234, %v1232
        %v1255 = vpack.c.b16 %v1235, %v1233
        %v1256 = vpack.c.b16 %v1238, %v1236
        %v1257 = vpack.c.b16 %v1239, %v1237
        %v1258 = vpack.c.b16 %v1242, %v1240
        %v1259 = vpack.c.b16 %v1243, %v1241
        %v1260 = vpack.c.b16 %v1246, %v1244
        %v1261 = vpack.c.b16 %v1247, %v1245
        %v1262 = vpack.c.b16 %v1250, %v1248
        %v1263 = vpack.c.b16 %v1251, %v1249
        %vm1276 = vcmask 785408
        %v1278 = vsel %vm1276, %v1214, 0
        %v1281 = vsel %vm1276, %v1215, 0
        %1283 = vmatpush.bf16.msra.mxu0 0
        %1284 = vmatpush.bf16.msra.mxu0 0
        %1285 = vmatpush.bf16.msra.mxu0 %v1262
        %1286 = vmatpush.bf16.msra.mxu0 %v1260
        %1287 = vmatpush.bf16.msra.mxu0 %v1258
        %1288 = vmatpush.bf16.msra.mxu0 %v1256
        %1289 = vmatpush.bf16.msra.mxu0 %v1254
        %1290 = vmatpush.bf16.msra.mxu0 %v1252
        %1291 = vmatmul.bf16.gmra.mxu0 %v1278
        %v1292 = vpop.f32.mrf.mxu0
        %v1293 = vadd.f32 0.0, %v1292
        %v1294 = vpop.f32.mrf.mxu0
        %v1295 = vadd.f32 0.0, %v1294
        %1296 = vmatmul.bf16.gmra.mxu0 %v1281
        %v1297 = vpop.f32.mrf.mxu0
        %v1298 = vadd.f32 0.0, %v1297
        %v1299 = vpop.f32.mrf.mxu0
        %v1300 = vadd.f32 0.0, %v1299
        %1301 = vdwg.mxu0
        %1302 = vmatpush.bf16.msra.mxu0 0
        %1303 = vmatpush.bf16.msra.mxu0 0
        %1304 = vmatpush.bf16.msra.mxu0 %v1263
        %1305 = vmatpush.bf16.msra.mxu0 %v1261
        %1306 = vmatpush.bf16.msra.mxu0 %v1259
        %1307 = vmatpush.bf16.msra.mxu0 %v1257
        %1308 = vmatpush.bf16.msra.mxu0 %v1255
        %1309 = vmatpush.bf16.msra.mxu0 %v1253
        %1310 = vmatmul.bf16.gmra.mxu0 %v1278
        %v1311 = vpop.f32.mrf.mxu0
        %v1312 = vadd.f32 0.0, %v1311
        %v1313 = vpop.f32.mrf.mxu0
        %v1314 = vadd.f32 0.0, %v1313
        %1315 = vmatmul.bf16.gmra.mxu0 %v1281
        %v1316 = vpop.f32.mrf.mxu0
        %v1317 = vadd.f32 0.0, %v1316
        %v1318 = vpop.f32.mrf.mxu0
        %v1319 = vadd.f32 0.0, %v1318
        %1320 = vdwg.mxu0
        %v1325 = vunpack.c.l.b16 %v1161
        %v1326 = vunpack.c.l.b16 %v1162
        %v1327 = vunpack.c.l.b16 %v1163
        %v1328 = vunpack.c.l.b16 %v1164
        %v1329 = vpack.c.b16 %v1326, %v1325
        %v1330 = vpack.c.b16 %v1328, %v1327
        %v1355 = vunpack.c.l.b16 %v1165
        %v1356 = vunpack.c.h.b16 %v1165
        %v1357 = vunpack.c.l.b16 %v1166
        %v1358 = vunpack.c.l.b16 %v1167
        %v1359 = vunpack.c.h.b16 %v1167
        %v1360 = vunpack.c.l.b16 %v1168
        %v1361 = vunpack.c.l.b16 %v1169
        %v1362 = vunpack.c.h.b16 %v1169
        %v1363 = vunpack.c.l.b16 %v1170
        %v1364 = vunpack.c.l.b16 %v1171
        %v1365 = vunpack.c.h.b16 %v1171
        %v1366 = vunpack.c.l.b16 %v1172
        %v1367 = vunpack.c.l.b16 %v1173
        %v1368 = vunpack.c.h.b16 %v1173
        %v1369 = vunpack.c.l.b16 %v1174
        %v1370 = vunpack.c.l.b16 %v1175
        %v1371 = vunpack.c.h.b16 %v1175
        %v1372 = vunpack.c.l.b16 %v1176
        %v1373 = vunpack.c.l.b16 %v1177
        %v1374 = vunpack.c.h.b16 %v1177
        %v1375 = vunpack.c.l.b16 %v1178
        %v1376 = vunpack.c.l.b16 %v1179
        %v1377 = vunpack.c.h.b16 %v1179
        %v1378 = vunpack.c.l.b16 %v1180
        %v1379 = vunpack.c.l.b16 %v1181
        %v1380 = vunpack.c.h.b16 %v1181
        %v1381 = vunpack.c.l.b16 %v1182
        %v1382 = vunpack.c.l.b16 %v1183
        %v1383 = vunpack.c.h.b16 %v1183
        %v1384 = vunpack.c.l.b16 %v1184
        %v1385 = vunpack.c.l.b16 %v1185
        %v1386 = vunpack.c.h.b16 %v1185
        %v1387 = vunpack.c.l.b16 %v1186
        %v1388 = vunpack.c.l.b16 %v1187
        %v1389 = vunpack.c.h.b16 %v1187
        %v1390 = vunpack.c.l.b16 %v1188
        %v1391 = vpack.c.b16 %v1358, %v1355
        %v1392 = vpack.c.b16 %v1359, %v1356
        %v1393 = vpack.c.b16 %v1360, %v1357
        %v1394 = vpack.c.b16 %v1364, %v1361
        %v1395 = vpack.c.b16 %v1365, %v1362
        %v1396 = vpack.c.b16 %v1366, %v1363
        %v1397 = vpack.c.b16 %v1370, %v1367
        %v1398 = vpack.c.b16 %v1371, %v1368
        %v1399 = vpack.c.b16 %v1372, %v1369
        %v1400 = vpack.c.b16 %v1376, %v1373
        %v1401 = vpack.c.b16 %v1377, %v1374
        %v1402 = vpack.c.b16 %v1378, %v1375
        %v1403 = vpack.c.b16 %v1382, %v1379
        %v1404 = vpack.c.b16 %v1383, %v1380
        %v1405 = vpack.c.b16 %v1384, %v1381
        %v1406 = vpack.c.b16 %v1388, %v1385
        %v1407 = vpack.c.b16 %v1389, %v1386
        %v1408 = vpack.c.b16 %v1390, %v1387
        %1409 = vrot.lane.b32.xlu0 %v1391, 16
        %v1410 = vpop.permute.xlu0 %1409
        %1411 = vrot.lane.b32.xlu0 %v1392, 16
        %v1412 = vpop.permute.xlu0 %1411
        %1413 = vrot.lane.b32.xlu0 %v1393, 16
        %v1414 = vpop.permute.xlu0 %1413
        %1415 = vrot.lane.b32.xlu0 %v1394, 16
        %v1416 = vpop.permute.xlu0 %1415
        %1417 = vrot.lane.b32.xlu0 %v1395, 16
        %v1418 = vpop.permute.xlu0 %1417
        %1419 = vrot.lane.b32.xlu0 %v1396, 16
        %v1420 = vpop.permute.xlu0 %1419
        %1421 = vrot.lane.b32.xlu0 %v1397, 16
        %v1422 = vpop.permute.xlu0 %1421
        %1423 = vrot.lane.b32.xlu0 %v1398, 16
        %v1424 = vpop.permute.xlu0 %1423
        %1425 = vrot.lane.b32.xlu0 %v1399, 16
        %v1426 = vpop.permute.xlu0 %1425
        %1427 = vrot.lane.b32.xlu0 %v1400, 16
        %v1428 = vpop.permute.xlu0 %1427
        %1429 = vrot.lane.b32.xlu0 %v1401, 16
        %v1430 = vpop.permute.xlu0 %1429
        %1431 = vrot.lane.b32.xlu0 %v1402, 16
        %v1432 = vpop.permute.xlu0 %1431
        %1433 = vrot.lane.b32.xlu0 %v1403, 16
        %v1434 = vpop.permute.xlu0 %1433
        %1435 = vrot.lane.b32.xlu0 %v1404, 16
        %v1436 = vpop.permute.xlu0 %1435
        %1437 = vrot.lane.b32.xlu0 %v1405, 16
        %v1438 = vpop.permute.xlu0 %1437
        %1439 = vrot.lane.b32.xlu0 %v1406, 16
        %v1440 = vpop.permute.xlu0 %1439
        %1441 = vrot.lane.b32.xlu0 %v1407, 16
        %v1442 = vpop.permute.xlu0 %1441
        %1443 = vrot.lane.b32.xlu0 %v1408, 16
        %v1444 = vpop.permute.xlu0 %1443
        %v1445 = vsel %vm853, %v1410, %v1412
        %v1446 = vsel %vm853, %v1412, %v1414
        %v1447 = vsel %vm853, %v1416, %v1418
        %v1448 = vsel %vm853, %v1418, %v1420
        %v1449 = vsel %vm853, %v1422, %v1424
        %v1450 = vsel %vm853, %v1424, %v1426
        %v1451 = vsel %vm853, %v1428, %v1430
        %v1452 = vsel %vm853, %v1430, %v1432
        %v1453 = vsel %vm853, %v1434, %v1436
        %v1454 = vsel %vm853, %v1436, %v1438
        %v1455 = vsel %vm853, %v1440, %v1442
        %v1456 = vsel %vm853, %v1442, %v1444
        %v1470 = vsel %vm1276, %v1329, 0
        %v1473 = vsel %vm1276, %v1330, 0
        %1475 = vmatpush.bf16.msra.mxu0 0
        %1476 = vmatpush.bf16.msra.mxu0 0
        %1477 = vmatpush.bf16.msra.mxu0 %v1455
        %1478 = vmatpush.bf16.msra.mxu0 %v1453
        %1479 = vmatpush.bf16.msra.mxu0 %v1451
        %1480 = vmatpush.bf16.msra.mxu0 %v1449
        %1481 = vmatpush.bf16.msra.mxu0 %v1447
        %1482 = vmatpush.bf16.msra.mxu0 %v1445
        %1483 = vmatmul.bf16.gmra.mxu0 %v1470
        %v1484 = vpop.f32.mrf.mxu0
        %v1485 = vadd.f32 %v1293, %v1484
        %v1486 = vpop.f32.mrf.mxu0
        %v1487 = vadd.f32 %v1295, %v1486
        %1488 = vmatmul.bf16.gmra.mxu0 %v1473
        %v1489 = vpop.f32.mrf.mxu0
        %v1490 = vadd.f32 %v1298, %v1489
        %v1491 = vpop.f32.mrf.mxu0
        %v1492 = vadd.f32 %v1300, %v1491
        %1493 = vdwg.mxu0
        %1494 = vmatpush.bf16.msra.mxu0 0
        %1495 = vmatpush.bf16.msra.mxu0 0
        %1496 = vmatpush.bf16.msra.mxu0 %v1456
        %1497 = vmatpush.bf16.msra.mxu0 %v1454
        %1498 = vmatpush.bf16.msra.mxu0 %v1452
        %1499 = vmatpush.bf16.msra.mxu0 %v1450
        %1500 = vmatpush.bf16.msra.mxu0 %v1448
        %1501 = vmatpush.bf16.msra.mxu0 %v1446
        %1502 = vmatmul.bf16.gmra.mxu0 %v1470
        %v1503 = vpop.f32.mrf.mxu0
        %v1504 = vadd.f32 %v1312, %v1503
        %v1505 = vpop.f32.mrf.mxu0
        %v1506 = vadd.f32 %v1314, %v1505
        %1507 = vmatmul.bf16.gmra.mxu0 %v1473
        %v1508 = vpop.f32.mrf.mxu0
        %v1509 = vadd.f32 %v1317, %v1508
        %v1510 = vpop.f32.mrf.mxu0
        %v1511 = vadd.f32 %v1319, %v1510
        %1512 = vdwg.mxu0
        %s1513 = scalar_lea.vmem %s7, 32
        %v1514 = vld [vmem:[%s1513] sm:$0xf]
        %v1515 = vld [vmem:[%s1513 + $0x4] sm:$0xf]
        %v1516 = vld [vmem:[%s1513 + $0x8] sm:$0xf]
        %v1517 = vld [vmem:[%s1513 + $0xc] sm:$0xf]
        %v1518 = vld [vmem:[#allocation3 + $0x4] sm:$0xff]
        %v1519 = vld [vmem:[#allocation3 + $0xc] sm:$0xf]
        %v1520 = vld [vmem:[#allocation3 + $0x14] sm:$0xff]
        %v1521 = vld [vmem:[#allocation3 + $0x1c] sm:$0xf]
        %v1522 = vld [vmem:[#allocation3 + $0x24] sm:$0xff]
        %v1523 = vld [vmem:[#allocation3 + $0x2c] sm:$0xf]
        %v1524 = vld [vmem:[#allocation3 + $0x34] sm:$0xff]
        %v1525 = vld [vmem:[#allocation3 + $0x3c] sm:$0xf]
        %v1526 = vld [vmem:[#allocation3 + $0x44] sm:$0xff]
        %v1527 = vld [vmem:[#allocation3 + $0x4c] sm:$0xf]
        %v1528 = vld [vmem:[#allocation3 + $0x54] sm:$0xff]
        %v1529 = vld [vmem:[#allocation3 + $0x5c] sm:$0xf]
        %v1530 = vld [vmem:[#allocation3 + $0x64] sm:$0xff]
        %v1531 = vld [vmem:[#allocation3 + $0x6c] sm:$0xf]
        %v1532 = vld [vmem:[#allocation3 + $0x74] sm:$0xff]
        %v1533 = vld [vmem:[#allocation3 + $0x7c] sm:$0xf]
        %v1534 = vld [vmem:[#allocation3 + $0x84] sm:$0xff]
        %v1535 = vld [vmem:[#allocation3 + $0x8c] sm:$0xf]
        %v1536 = vld [vmem:[#allocation3 + $0x94] sm:$0xff]
        %v1537 = vld [vmem:[#allocation3 + $0x9c] sm:$0xf]
        %v1538 = vld [vmem:[#allocation3 + $0xa4] sm:$0xff]
        %v1539 = vld [vmem:[#allocation3 + $0xac] sm:$0xf]
        %v1540 = vld [vmem:[#allocation3 + $0xb4] sm:$0xff]
        %v1541 = vld [vmem:[#allocation3 + $0xbc] sm:$0xf]
        %v1546 = vunpack.c.l.b16 %v1514
        %v1547 = vunpack.c.l.b16 %v1515
        %v1548 = vunpack.c.l.b16 %v1516
        %v1549 = vunpack.c.l.b16 %v1517
        %v1550 = vpack.c.b16 %v1547, %v1546
        %v1551 = vpack.c.b16 %v1549, %v1548
        %v1576 = vunpack.c.l.b16 %v1518
        %v1577 = vunpack.c.h.b16 %v1518
        %v1578 = vunpack.c.l.b16 %v1519
        %v1579 = vunpack.c.l.b16 %v1520
        %v1580 = vunpack.c.h.b16 %v1520
        %v1581 = vunpack.c.l.b16 %v1521
        %v1582 = vunpack.c.l.b16 %v1522
        %v1583 = vunpack.c.h.b16 %v1522
        %v1584 = vunpack.c.l.b16 %v1523
        %v1585 = vunpack.c.l.b16 %v1524
        %v1586 = vunpack.c.h.b16 %v1524
        %v1587 = vunpack.c.l.b16 %v1525
        %v1588 = vunpack.c.l.b16 %v1526
        %v1589 = vunpack.c.h.b16 %v1526
        %v1590 = vunpack.c.l.b16 %v1527
        %v1591 = vunpack.c.l.b16 %v1528
        %v1592 = vunpack.c.h.b16 %v1528
        %v1593 = vunpack.c.l.b16 %v1529
        %v1594 = vunpack.c.l.b16 %v1530
        %v1595 = vunpack.c.h.b16 %v1530
        %v1596 = vunpack.c.l.b16 %v1531
        %v1597 = vunpack.c.l.b16 %v1532
        %v1598 = vunpack.c.h.b16 %v1532
        %v1599 = vunpack.c.l.b16 %v1533
        %v1600 = vunpack.c.l.b16 %v1534
        %v1601 = vunpack.c.h.b16 %v1534
        %v1602 = vunpack.c.l.b16 %v1535
        %v1603 = vunpack.c.l.b16 %v1536
        %v1604 = vunpack.c.h.b16 %v1536
        %v1605 = vunpack.c.l.b16 %v1537
        %v1606 = vunpack.c.l.b16 %v1538
        %v1607 = vunpack.c.h.b16 %v1538
        %v1608 = vunpack.c.l.b16 %v1539
        %v1609 = vunpack.c.l.b16 %v1540
        %v1610 = vunpack.c.h.b16 %v1540
        %v1611 = vunpack.c.l.b16 %v1541
        %v1612 = vpack.c.b16 %v1579, %v1576
        %v1613 = vpack.c.b16 %v1580, %v1577
        %v1614 = vpack.c.b16 %v1581, %v1578
        %v1615 = vpack.c.b16 %v1585, %v1582
        %v1616 = vpack.c.b16 %v1586, %v1583
        %v1617 = vpack.c.b16 %v1587, %v1584
        %v1618 = vpack.c.b16 %v1591, %v1588
        %v1619 = vpack.c.b16 %v1592, %v1589
        %v1620 = vpack.c.b16 %v1593, %v1590
        %v1621 = vpack.c.b16 %v1597, %v1594
        %v1622 = vpack.c.b16 %v1598, %v1595
        %v1623 = vpack.c.b16 %v1599, %v1596
        %v1624 = vpack.c.b16 %v1603, %v1600
        %v1625 = vpack.c.b16 %v1604, %v1601
        %v1626 = vpack.c.b16 %v1605, %v1602
        %v1627 = vpack.c.b16 %v1609, %v1606
        %v1628 = vpack.c.b16 %v1610, %v1607
        %v1629 = vpack.c.b16 %v1611, %v1608
        %1630 = vrot.lane.b32.xlu0 %v1612, 112
        %v1631 = vpop.permute.xlu0 %1630
        %1632 = vrot.lane.b32.xlu0 %v1613, 112
        %v1633 = vpop.permute.xlu0 %1632
        %1634 = vrot.lane.b32.xlu0 %v1614, 112
        %v1635 = vpop.permute.xlu0 %1634
        %1636 = vrot.lane.b32.xlu0 %v1615, 112
        %v1637 = vpop.permute.xlu0 %1636
        %1638 = vrot.lane.b32.xlu0 %v1616, 112
        %v1639 = vpop.permute.xlu0 %1638
        %1640 = vrot.lane.b32.xlu0 %v1617, 112
        %v1641 = vpop.permute.xlu0 %1640
        %1642 = vrot.lane.b32.xlu0 %v1618, 112
        %v1643 = vpop.permute.xlu0 %1642
        %1644 = vrot.lane.b32.xlu0 %v1619, 112
        %v1645 = vpop.permute.xlu0 %1644
        %1646 = vrot.lane.b32.xlu0 %v1620, 112
        %v1647 = vpop.permute.xlu0 %1646
        %1648 = vrot.lane.b32.xlu0 %v1621, 112
        %v1649 = vpop.permute.xlu0 %1648
        %1650 = vrot.lane.b32.xlu0 %v1622, 112
        %v1651 = vpop.permute.xlu0 %1650
        %1652 = vrot.lane.b32.xlu0 %v1623, 112
        %v1653 = vpop.permute.xlu0 %1652
        %1654 = vrot.lane.b32.xlu0 %v1624, 112
        %v1655 = vpop.permute.xlu0 %1654
        %1656 = vrot.lane.b32.xlu0 %v1625, 112
        %v1657 = vpop.permute.xlu0 %1656
        %1658 = vrot.lane.b32.xlu0 %v1626, 112
        %v1659 = vpop.permute.xlu0 %1658
        %1660 = vrot.lane.b32.xlu0 %v1627, 112
        %v1661 = vpop.permute.xlu0 %1660
        %1662 = vrot.lane.b32.xlu0 %v1628, 112
        %v1663 = vpop.permute.xlu0 %1662
        %1664 = vrot.lane.b32.xlu0 %v1629, 112
        %v1665 = vpop.permute.xlu0 %1664
        %v1666 = vsel %vm964, %v1631, %v1633
        %v1667 = vsel %vm964, %v1633, %v1635
        %v1668 = vsel %vm964, %v1637, %v1639
        %v1669 = vsel %vm964, %v1639, %v1641
        %v1670 = vsel %vm964, %v1643, %v1645
        %v1671 = vsel %vm964, %v1645, %v1647
        %v1672 = vsel %vm964, %v1649, %v1651
        %v1673 = vsel %vm964, %v1651, %v1653
        %v1674 = vsel %vm964, %v1655, %v1657
        %v1675 = vsel %vm964, %v1657, %v1659
        %v1676 = vsel %vm964, %v1661, %v1663
        %v1677 = vsel %vm964, %v1663, %v1665
        %v1691 = vsel %vm1276, %v1550, 0
        %v1694 = vsel %vm1276, %v1551, 0
        %1696 = vmatpush.bf16.msra.mxu0 0
        %1697 = vmatpush.bf16.msra.mxu0 0
        %1698 = vmatpush.bf16.msra.mxu0 %v1676
        %1699 = vmatpush.bf16.msra.mxu0 %v1674
        %1700 = vmatpush.bf16.msra.mxu0 %v1672
        %1701 = vmatpush.bf16.msra.mxu0 %v1670
        %1702 = vmatpush.bf16.msra.mxu0 %v1668
        %1703 = vmatpush.bf16.msra.mxu0 %v1666
        %1704 = vmatmul.bf16.gmra.mxu0 %v1691
        %v1705 = vpop.f32.mrf.mxu0
        %v1706 = vadd.f32 0.0, %v1705
        %v1707 = vpop.f32.mrf.mxu0
        %v1708 = vadd.f32 0.0, %v1707
        %1709 = vmatmul.bf16.gmra.mxu0 %v1694
        %v1710 = vpop.f32.mrf.mxu0
        %v1711 = vadd.f32 0.0, %v1710
        %v1712 = vpop.f32.mrf.mxu0
        %v1713 = vadd.f32 0.0, %v1712
        %1714 = vdwg.mxu0
        %1715 = vmatpush.bf16.msra.mxu0 0
        %1716 = vmatpush.bf16.msra.mxu0 0
        %1717 = vmatpush.bf16.msra.mxu0 %v1677
        %1718 = vmatpush.bf16.msra.mxu0 %v1675
        %1719 = vmatpush.bf16.msra.mxu0 %v1673
        %1720 = vmatpush.bf16.msra.mxu0 %v1671
        %1721 = vmatpush.bf16.msra.mxu0 %v1669
        %1722 = vmatpush.bf16.msra.mxu0 %v1667
        %1723 = vmatmul.bf16.gmra.mxu0 %v1691
        %v1724 = vpop.f32.mrf.mxu0
        %v1725 = vadd.f32 0.0, %v1724
        %v1726 = vpop.f32.mrf.mxu0
        %v1727 = vadd.f32 0.0, %v1726
        %1728 = vmatmul.bf16.gmra.mxu0 %v1694
        %v1729 = vpop.f32.mrf.mxu0
        %v1730 = vadd.f32 0.0, %v1729
        %v1731 = vpop.f32.mrf.mxu0
        %v1732 = vadd.f32 0.0, %v1731
        %1733 = vdwg.mxu0
        %v1734 = vadd.f32 %v1485, %v1706
        %v1735 = vadd.f32 %v1504, %v1725
        %v1736 = vadd.f32 %v1487, %v1708
        %v1737 = vadd.f32 %v1506, %v1727
        %v1738 = vadd.f32 %v1490, %v1711
        %v1739 = vadd.f32 %v1509, %v1730
        %v1740 = vadd.f32 %v1492, %v1713
        %v1741 = vadd.f32 %v1511, %v1732
        %v1742 = vld [vmem:[%s8] sm:$0xff]
        %v1743 = vld [vmem:[%s8 + $0x8] sm:$0xff]
        %v1744 = vld [vmem:[%s8 + $0x10] sm:$0xff]
        %v1745 = vld [vmem:[%s8 + $0x18] sm:$0xff]
        %1747 = vset.pattern.permute.xlu0 0
        %1748 = vperm.xlu0 %1747, %v1742
        %v1749 = vpop.permute.xlu0 %1748
        %1752 = vset.pattern.permute.xlu0 0
        %1753 = vperm.xlu0 %1752, %v1743
        %v1754 = vpop.permute.xlu0 %1753
        %1757 = vset.pattern.permute.xlu0 0
        %1758 = vperm.xlu0 %1757, %v1744
        %v1759 = vpop.permute.xlu0 %1758
        %1762 = vset.pattern.permute.xlu0 0
        %1763 = vperm.xlu0 %1762, %v1745
        %v1764 = vpop.permute.xlu0 %1763
        %v1766 = vadd.f32 %v1734, %v1749
        %v1767 = vadd.f32 %v1735, %v1749
        %v1768 = vadd.f32 %v1736, %v1754
        %v1769 = vadd.f32 %v1737, %v1754
        %v1770 = vadd.f32 %v1738, %v1759
        %v1771 = vadd.f32 %v1739, %v1759
        %v1772 = vadd.f32 %v1740, %v1764
        %v1773 = vadd.f32 %v1741, %v1764
        %v1774 = vmax.f32 %v1766, 0.0
        %v1775 = vmax.f32 %v1767, 0.0
        %v1776 = vmax.f32 %v1768, 0.0
        %v1777 = vmax.f32 %v1769, 0.0
        %v1778 = vmax.f32 %v1770, 0.0
        %v1779 = vmax.f32 %v1771, 0.0
        %v1780 = vmax.f32 %v1772, 0.0
        %v1781 = vmax.f32 %v1773, 0.0
        %v1782 = vpack.c.bf16 %v1775, %v1774
        %v1783 = vpack.c.bf16 %v1777, %v1776
        %v1784 = vpack.c.bf16 %v1779, %v1778
        %v1785 = vpack.c.bf16 %v1781, %v1780
        %v1786 = vsel %vm662, %v1782, 0
        %v1787 = vsel %vm662, %v1783, 0
        %v1788 = vsel %vm662, %v1784, 0
        %v1789 = vsel %vm662, %v1785, 0
        %1794 = vrot.lane.b32.xlu0 %v1786, 1
        %v1795 = vpop.permute.xlu0 %1794
        %1796 = vrot.lane.b32.xlu0 %v1787, 1
        %v1797 = vpop.permute.xlu0 %1796
        %1798 = vrot.lane.b32.xlu0 %v1788, 1
        %v1799 = vpop.permute.xlu0 %1798
        %1800 = vrot.lane.b32.xlu0 %v1789, 1
        %v1801 = vpop.permute.xlu0 %1800
        %v1802 = vrot.slane %v1795, 4
        %v1803 = vrot.slane %v1797, 4
        %v1804 = vrot.slane %v1799, 4
        %v1805 = vrot.slane %v1801, 4
        %v1806 = vsel %vm668, %v1802, %v1795
        %v1807 = vsel %vm668, %v1803, %v1797
        %v1808 = vsel %vm668, %v1804, %v1799
        %v1809 = vsel %vm668, %v1805, %v1801
        %1818 = vst.msk [vmem:[#allocation3 + $0x4] sm:$0xff] %vm1106, %v1806
        %1819 = vst.msk [vmem:[#allocation3 + $0xc] sm:$0xf] %vm1108, %v1802
        %1820 = vst.msk [vmem:[#allocation3 + $0x14] sm:$0xff] %vm1106, %v1807
        %1821 = vst.msk [vmem:[#allocation3 + $0x1c] sm:$0xf] %vm1108, %v1803
        %1822 = vst.msk [vmem:[#allocation3 + $0x24] sm:$0xff] %vm1106, %v1808
        %1823 = vst.msk [vmem:[#allocation3 + $0x2c] sm:$0xf] %vm1108, %v1804
        %1824 = vst.msk [vmem:[#allocation3 + $0x34] sm:$0xff] %vm1106, %v1809
        %1825 = vst.msk [vmem:[#allocation3 + $0x3c] sm:$0xf] %vm1108, %v1805
        %1826 = vst [vmem:[#allocation3 + $0x44] sm:$0xff] %v1782
        %1827 = vst [vmem:[#allocation3 + $0x54] sm:$0xff] %v1783
        %1828 = vst [vmem:[#allocation3 + $0x64] sm:$0xff] %v1784
        %1829 = vst [vmem:[#allocation3 + $0x74] sm:$0xff] %v1785
        %v1830 = vsel %vm689, %v1782, 0
        %v1831 = vsel %vm689, %v1783, 0
        %v1832 = vsel %vm689, %v1784, 0
        %v1833 = vsel %vm689, %v1785, 0
        %1838 = vrot.lane.b32.xlu0 %v1830, 127
        %v1839 = vpop.permute.xlu0 %1838
        %1840 = vrot.lane.b32.xlu0 %v1831, 127
        %v1841 = vpop.permute.xlu0 %1840
        %1842 = vrot.lane.b32.xlu0 %v1832, 127
        %v1843 = vpop.permute.xlu0 %1842
        %1844 = vrot.lane.b32.xlu0 %v1833, 127
        %v1845 = vpop.permute.xlu0 %1844
        %v1846 = vrot.slane %v1839, 4
        %v1847 = vrot.slane %v1841, 4
        %v1848 = vrot.slane %v1843, 4
        %v1849 = vrot.slane %v1845, 4
        %v1850 = vsel %vm700, %v1846, %v1839
        %v1851 = vsel %vm700, %v1847, %v1841
        %v1852 = vsel %vm700, %v1848, %v1843
        %v1853 = vsel %vm700, %v1849, %v1845
        %1862 = vst.msk [vmem:[#allocation3 + $0x80] sm:$0xff] %vm419, %v1850
        %1863 = vst.msk [vmem:[#allocation3 + $0x88] sm:$0xf] %vm1153, %v1846
        %1864 = vst.msk [vmem:[#allocation3 + $0x90] sm:$0xff] %vm419, %v1851
        %1865 = vst.msk [vmem:[#allocation3 + $0x98] sm:$0xf] %vm1153, %v1847
        %1866 = vst.msk [vmem:[#allocation3 + $0xa0] sm:$0xff] %vm419, %v1852
        %1867 = vst.msk [vmem:[#allocation3 + $0xa8] sm:$0xf] %vm1153, %v1848
        %1868 = vst.msk [vmem:[#allocation3 + $0xb0] sm:$0xff] %vm419, %v1853
        %1869 = vst.msk [vmem:[#allocation3 + $0xb8] sm:$0xf] %vm1153, %v1849
        %v1870 = vld [vmem:[%s9] sm:$0x3]
        %v1871 = vld [vmem:[#allocation3] sm:$0xff]
        %v1872 = vld [vmem:[#allocation3 + $0x8] sm:$0xf]
        %v1873 = vld [vmem:[#allocation3 + $0x10] sm:$0xff]
        %v1874 = vld [vmem:[#allocation3 + $0x18] sm:$0xf]
        %v1875 = vld [vmem:[#allocation3 + $0x20] sm:$0xff]
        %v1876 = vld [vmem:[#allocation3 + $0x28] sm:$0xf]
        %v1877 = vld [vmem:[#allocation3 + $0x30] sm:$0xff]
        %v1878 = vld [vmem:[#allocation3 + $0x38] sm:$0xf]
        %v1879 = vld [vmem:[#allocation3 + $0x40] sm:$0xff]
        %v1880 = vld [vmem:[#allocation3 + $0x48] sm:$0xf]
        %v1881 = vld [vmem:[#allocation3 + $0x50] sm:$0xff]
        %v1882 = vld [vmem:[#allocation3 + $0x58] sm:$0xf]
        %v1883 = vld [vmem:[#allocation3 + $0x60] sm:$0xff]
        %v1884 = vld [vmem:[#allocation3 + $0x68] sm:$0xf]
        %v1885 = vld [vmem:[#allocation3 + $0x70] sm:$0xff]
        %v1886 = vld [vmem:[#allocation3 + $0x78] sm:$0xf]
        %v1887 = vld [vmem:[#allocation3 + $0x80] sm:$0xff]
        %v1888 = vld [vmem:[#allocation3 + $0x88] sm:$0xf]
        %v1889 = vld [vmem:[#allocation3 + $0x90] sm:$0xff]
        %v1890 = vld [vmem:[#allocation3 + $0x98] sm:$0xf]
        %v1891 = vld [vmem:[#allocation3 + $0xa0] sm:$0xff]
        %v1892 = vld [vmem:[#allocation3 + $0xa8] sm:$0xf]
        %v1893 = vld [vmem:[#allocation3 + $0xb0] sm:$0xff]
        %v1894 = vld [vmem:[#allocation3 + $0xb8] sm:$0xf]
        %s1895 = scalar_lea.vmem %s9, 2
        %v1896 = vld [vmem:[%s1895] sm:$0x3]
        %v1897 = vld [vmem:[#allocation3 + $0x4] sm:$0xff]
        %v1898 = vld [vmem:[#allocation3 + $0x14] sm:$0xff]
        %v1899 = vld [vmem:[#allocation3 + $0x24] sm:$0xff]
        %v1900 = vld [vmem:[#allocation3 + $0x34] sm:$0xff]
        %v1901 = vld [vmem:[#allocation3 + $0x44] sm:$0xff]
        %v1902 = vld [vmem:[#allocation3 + $0x54] sm:$0xff]
        %v1903 = vld [vmem:[#allocation3 + $0x64] sm:$0xff]
        %v1904 = vld [vmem:[#allocation3 + $0x74] sm:$0xff]
        %v1905 = vld [vmem:[#allocation3 + $0x84] sm:$0xff]
        %v1906 = vld [vmem:[#allocation3 + $0x94] sm:$0xff]
        %v1907 = vld [vmem:[#allocation3 + $0xa4] sm:$0xff]
        %v1908 = vld [vmem:[#allocation3 + $0xb4] sm:$0xff]
        %v1921 = vunpack.c.l.b16 %v1897
        %v1922 = vunpack.c.h.b16 %v1897
        %v1923 = vunpack.c.l.b16 %v1898
        %v1924 = vunpack.c.h.b16 %v1898
        %v1925 = vunpack.c.l.b16 %v1899
        %v1926 = vunpack.c.h.b16 %v1899
        %v1927 = vunpack.c.l.b16 %v1900
        %v1928 = vunpack.c.h.b16 %v1900
        %v1929 = vunpack.c.l.b16 %v1901
        %v1930 = vunpack.c.h.b16 %v1901
        %v1931 = vunpack.c.l.b16 %v1902
        %v1932 = vunpack.c.h.b16 %v1902
        %v1933 = vunpack.c.l.b16 %v1903
        %v1934 = vunpack.c.h.b16 %v1903
        %v1935 = vunpack.c.l.b16 %v1904
        %v1936 = vunpack.c.h.b16 %v1904
        %v1937 = vunpack.c.l.b16 %v1905
        %v1938 = vunpack.c.h.b16 %v1905
        %v1939 = vunpack.c.l.b16 %v1906
        %v1940 = vunpack.c.h.b16 %v1906
        %v1941 = vunpack.c.l.b16 %v1907
        %v1942 = vunpack.c.h.b16 %v1907
        %v1943 = vunpack.c.l.b16 %v1908
        %v1944 = vunpack.c.h.b16 %v1908
        %v1945 = vpack.c.b16 %v1923, %v1921
        %v1946 = vpack.c.b16 %v1924, %v1922
        %v1947 = vpack.c.b16 %v1927, %v1925
        %v1948 = vpack.c.b16 %v1928, %v1926
        %v1949 = vpack.c.b16 %v1931, %v1929
        %v1950 = vpack.c.b16 %v1932, %v1930
        %v1951 = vpack.c.b16 %v1935, %v1933
        %v1952 = vpack.c.b16 %v1936, %v1934
        %v1953 = vpack.c.b16 %v1939, %v1937
        %v1954 = vpack.c.b16 %v1940, %v1938
        %v1955 = vpack.c.b16 %v1943, %v1941
        %v1956 = vpack.c.b16 %v1944, %v1942
        %v1970 = vsel %vm1276, %v1896, 0
        %1972 = vmatpush.bf16.msra.mxu0 0
        %1973 = vmatpush.bf16.msra.mxu0 0
        %1974 = vmatpush.bf16.msra.mxu0 %v1955
        %1975 = vmatpush.bf16.msra.mxu0 %v1953
        %1976 = vmatpush.bf16.msra.mxu0 %v1951
        %1977 = vmatpush.bf16.msra.mxu0 %v1949
        %1978 = vmatpush.bf16.msra.mxu0 %v1947
        %1979 = vmatpush.bf16.msra.mxu0 %v1945
        %1980 = vmatmul.bf16.gmra.mxu0 %v1970
        %v1981 = vpop.f32.mrf.mxu0
        %v1982 = vadd.f32 0.0, %v1981
        %v1983 = vpop.f32.mrf.mxu0
        %1984 = vdwg.mxu0
        %1985 = vmatpush.bf16.msra.mxu0 0
        %1986 = vmatpush.bf16.msra.mxu0 0
        %1987 = vmatpush.bf16.msra.mxu0 %v1956
        %1988 = vmatpush.bf16.msra.mxu0 %v1954
        %1989 = vmatpush.bf16.msra.mxu0 %v1952
        %1990 = vmatpush.bf16.msra.mxu0 %v1950
        %1991 = vmatpush.bf16.msra.mxu0 %v1948
        %1992 = vmatpush.bf16.msra.mxu0 %v1946
        %1993 = vmatmul.bf16.gmra.mxu0 %v1970
        %v1994 = vpop.f32.mrf.mxu0
        %v1995 = vadd.f32 0.0, %v1994
        %v1996 = vpop.f32.mrf.mxu0
        %1997 = vdwg.mxu0
        %v2022 = vunpack.c.l.b16 %v1871
        %v2023 = vunpack.c.h.b16 %v1871
        %v2024 = vunpack.c.l.b16 %v1872
        %v2025 = vunpack.c.l.b16 %v1873
        %v2026 = vunpack.c.h.b16 %v1873
        %v2027 = vunpack.c.l.b16 %v1874
        %v2028 = vunpack.c.l.b16 %v1875
        %v2029 = vunpack.c.h.b16 %v1875
        %v2030 = vunpack.c.l.b16 %v1876
        %v2031 = vunpack.c.l.b16 %v1877
        %v2032 = vunpack.c.h.b16 %v1877
        %v2033 = vunpack.c.l.b16 %v1878
        %v2034 = vunpack.c.l.b16 %v1879
        %v2035 = vunpack.c.h.b16 %v1879
        %v2036 = vunpack.c.l.b16 %v1880
        %v2037 = vunpack.c.l.b16 %v1881
        %v2038 = vunpack.c.h.b16 %v1881
        %v2039 = vunpack.c.l.b16 %v1882
        %v2040 = vunpack.c.l.b16 %v1883
        %v2041 = vunpack.c.h.b16 %v1883
        %v2042 = vunpack.c.l.b16 %v1884
        %v2043 = vunpack.c.l.b16 %v1885
        %v2044 = vunpack.c.h.b16 %v1885
        %v2045 = vunpack.c.l.b16 %v1886
        %v2046 = vunpack.c.l.b16 %v1887
        %v2047 = vunpack.c.h.b16 %v1887
        %v2048 = vunpack.c.l.b16 %v1888
        %v2049 = vunpack.c.l.b16 %v1889
        %v2050 = vunpack.c.h.b16 %v1889
        %v2051 = vunpack.c.l.b16 %v1890
        %v2052 = vunpack.c.l.b16 %v1891
        %v2053 = vunpack.c.h.b16 %v1891
        %v2054 = vunpack.c.l.b16 %v1892
        %v2055 = vunpack.c.l.b16 %v1893
        %v2056 = vunpack.c.h.b16 %v1893
        %v2057 = vunpack.c.l.b16 %v1894
        %v2058 = vpack.c.b16 %v2025, %v2022
        %v2059 = vpack.c.b16 %v2026, %v2023
        %v2060 = vpack.c.b16 %v2027, %v2024
        %v2061 = vpack.c.b16 %v2031, %v2028
        %v2062 = vpack.c.b16 %v2032, %v2029
        %v2063 = vpack.c.b16 %v2033, %v2030
        %v2064 = vpack.c.b16 %v2037, %v2034
        %v2065 = vpack.c.b16 %v2038, %v2035
        %v2066 = vpack.c.b16 %v2039, %v2036
        %v2067 = vpack.c.b16 %v2043, %v2040
        %v2068 = vpack.c.b16 %v2044, %v2041
        %v2069 = vpack.c.b16 %v2045, %v2042
        %v2070 = vpack.c.b16 %v2049, %v2046
        %v2071 = vpack.c.b16 %v2050, %v2047
        %v2072 = vpack.c.b16 %v2051, %v2048
        %v2073 = vpack.c.b16 %v2055, %v2052
        %v2074 = vpack.c.b16 %v2056, %v2053
        %v2075 = vpack.c.b16 %v2057, %v2054
        %2076 = vrot.lane.b32.xlu0 %v2058, 16
        %v2077 = vpop.permute.xlu0 %2076
        %2078 = vrot.lane.b32.xlu0 %v2059, 16
        %v2079 = vpop.permute.xlu0 %2078
        %2080 = vrot.lane.b32.xlu0 %v2060, 16
        %v2081 = vpop.permute.xlu0 %2080
        %2082 = vrot.lane.b32.xlu0 %v2061, 16
        %v2083 = vpop.permute.xlu0 %2082
        %2084 = vrot.lane.b32.xlu0 %v2062, 16
        %v2085 = vpop.permute.xlu0 %2084
        %2086 = vrot.lane.b32.xlu0 %v2063, 16
        %v2087 = vpop.permute.xlu0 %2086
        %2088 = vrot.lane.b32.xlu0 %v2064, 16
        %v2089 = vpop.permute.xlu0 %2088
        %2090 = vrot.lane.b32.xlu0 %v2065, 16
        %v2091 = vpop.permute.xlu0 %2090
        %2092 = vrot.lane.b32.xlu0 %v2066, 16
        %v2093 = vpop.permute.xlu0 %2092
        %2094 = vrot.lane.b32.xlu0 %v2067, 16
        %v2095 = vpop.permute.xlu0 %2094
        %2096 = vrot.lane.b32.xlu0 %v2068, 16
        %v2097 = vpop.permute.xlu0 %2096
        %2098 = vrot.lane.b32.xlu0 %v2069, 16
        %v2099 = vpop.permute.xlu0 %2098
        %2100 = vrot.lane.b32.xlu0 %v2070, 16
        %v2101 = vpop.permute.xlu0 %2100
        %2102 = vrot.lane.b32.xlu0 %v2071, 16
        %v2103 = vpop.permute.xlu0 %2102
        %2104 = vrot.lane.b32.xlu0 %v2072, 16
        %v2105 = vpop.permute.xlu0 %2104
        %2106 = vrot.lane.b32.xlu0 %v2073, 16
        %v2107 = vpop.permute.xlu0 %2106
        %2108 = vrot.lane.b32.xlu0 %v2074, 16
        %v2109 = vpop.permute.xlu0 %2108
        %2110 = vrot.lane.b32.xlu0 %v2075, 16
        %v2111 = vpop.permute.xlu0 %2110
        %v2112 = vsel %vm853, %v2077, %v2079
        %v2113 = vsel %vm853, %v2079, %v2081
        %v2114 = vsel %vm853, %v2083, %v2085
        %v2115 = vsel %vm853, %v2085, %v2087
        %v2116 = vsel %vm853, %v2089, %v2091
        %v2117 = vsel %vm853, %v2091, %v2093
        %v2118 = vsel %vm853, %v2095, %v2097
        %v2119 = vsel %vm853, %v2097, %v2099
        %v2120 = vsel %vm853, %v2101, %v2103
        %v2121 = vsel %vm853, %v2103, %v2105
        %v2122 = vsel %vm853, %v2107, %v2109
        %v2123 = vsel %vm853, %v2109, %v2111
        %v2137 = vsel %vm1276, %v1870, 0
        %2139 = vmatpush.bf16.msra.mxu0 0
        %2140 = vmatpush.bf16.msra.mxu0 0
        %2141 = vmatpush.bf16.msra.mxu0 %v2122
        %2142 = vmatpush.bf16.msra.mxu0 %v2120
        %2143 = vmatpush.bf16.msra.mxu0 %v2118
        %2144 = vmatpush.bf16.msra.mxu0 %v2116
        %2145 = vmatpush.bf16.msra.mxu0 %v2114
        %2146 = vmatpush.bf16.msra.mxu0 %v2112
        %2147 = vmatmul.bf16.gmra.mxu0 %v2137
        %v2148 = vpop.f32.mrf.mxu0
        %v2149 = vadd.f32 %v1982, %v2148
        %v2150 = vpop.f32.mrf.mxu0
        %2151 = vdwg.mxu0
        %2152 = vmatpush.bf16.msra.mxu0 0
        %2153 = vmatpush.bf16.msra.mxu0 0
        %2154 = vmatpush.bf16.msra.mxu0 %v2123
        %2155 = vmatpush.bf16.msra.mxu0 %v2121
        %2156 = vmatpush.bf16.msra.mxu0 %v2119
        %2157 = vmatpush.bf16.msra.mxu0 %v2117
        %2158 = vmatpush.bf16.msra.mxu0 %v2115
        %2159 = vmatpush.bf16.msra.mxu0 %v2113
        %2160 = vmatmul.bf16.gmra.mxu0 %v2137
        %v2161 = vpop.f32.mrf.mxu0
        %v2162 = vadd.f32 %v1995, %v2161
        %v2163 = vpop.f32.mrf.mxu0
        %2164 = vdwg.mxu0
        %s2165 = scalar_lea.vmem %s9, 4
        %v2166 = vld [vmem:[%s2165] sm:$0x3]
        %v2167 = vld [vmem:[#allocation3 + $0x4] sm:$0xff]
        %v2168 = vld [vmem:[#allocation3 + $0xc] sm:$0xf]
        %v2169 = vld [vmem:[#allocation3 + $0x14] sm:$0xff]
        %v2170 = vld [vmem:[#allocation3 + $0x1c] sm:$0xf]
        %v2171 = vld [vmem:[#allocation3 + $0x24] sm:$0xff]
        %v2172 = vld [vmem:[#allocation3 + $0x2c] sm:$0xf]
        %v2173 = vld [vmem:[#allocation3 + $0x34] sm:$0xff]
        %v2174 = vld [vmem:[#allocation3 + $0x3c] sm:$0xf]
        %v2175 = vld [vmem:[#allocation3 + $0x44] sm:$0xff]
        %v2176 = vld [vmem:[#allocation3 + $0x4c] sm:$0xf]
        %v2177 = vld [vmem:[#allocation3 + $0x54] sm:$0xff]
        %v2178 = vld [vmem:[#allocation3 + $0x5c] sm:$0xf]
        %v2179 = vld [vmem:[#allocation3 + $0x64] sm:$0xff]
        %v2180 = vld [vmem:[#allocation3 + $0x6c] sm:$0xf]
        %v2181 = vld [vmem:[#allocation3 + $0x74] sm:$0xff]
        %v2182 = vld [vmem:[#allocation3 + $0x7c] sm:$0xf]
        %v2183 = vld [vmem:[#allocation3 + $0x84] sm:$0xff]
        %v2184 = vld [vmem:[#allocation3 + $0x8c] sm:$0xf]
        %v2185 = vld [vmem:[#allocation3 + $0x94] sm:$0xff]
        %v2186 = vld [vmem:[#allocation3 + $0x9c] sm:$0xf]
        %v2187 = vld [vmem:[#allocation3 + $0xa4] sm:$0xff]
        %v2188 = vld [vmem:[#allocation3 + $0xac] sm:$0xf]
        %v2189 = vld [vmem:[#allocation3 + $0xb4] sm:$0xff]
        %v2190 = vld [vmem:[#allocation3 + $0xbc] sm:$0xf]
        %v2215 = vunpack.c.l.b16 %v2167
        %v2216 = vunpack.c.h.b16 %v2167
        %v2217 = vunpack.c.l.b16 %v2168
        %v2218 = vunpack.c.l.b16 %v2169
        %v2219 = vunpack.c.h.b16 %v2169
        %v2220 = vunpack.c.l.b16 %v2170
        %v2221 = vunpack.c.l.b16 %v2171
        %v2222 = vunpack.c.h.b16 %v2171
        %v2223 = vunpack.c.l.b16 %v2172
        %v2224 = vunpack.c.l.b16 %v2173
        %v2225 = vunpack.c.h.b16 %v2173
        %v2226 = vunpack.c.l.b16 %v2174
        %v2227 = vunpack.c.l.b16 %v2175
        %v2228 = vunpack.c.h.b16 %v2175
        %v2229 = vunpack.c.l.b16 %v2176
        %v2230 = vunpack.c.l.b16 %v2177
        %v2231 = vunpack.c.h.b16 %v2177
        %v2232 = vunpack.c.l.b16 %v2178
        %v2233 = vunpack.c.l.b16 %v2179
        %v2234 = vunpack.c.h.b16 %v2179
        %v2235 = vunpack.c.l.b16 %v2180
        %v2236 = vunpack.c.l.b16 %v2181
        %v2237 = vunpack.c.h.b16 %v2181
        %v2238 = vunpack.c.l.b16 %v2182
        %v2239 = vunpack.c.l.b16 %v2183
        %v2240 = vunpack.c.h.b16 %v2183
        %v2241 = vunpack.c.l.b16 %v2184
        %v2242 = vunpack.c.l.b16 %v2185
        %v2243 = vunpack.c.h.b16 %v2185
        %v2244 = vunpack.c.l.b16 %v2186
        %v2245 = vunpack.c.l.b16 %v2187
        %v2246 = vunpack.c.h.b16 %v2187
        %v2247 = vunpack.c.l.b16 %v2188
        %v2248 = vunpack.c.l.b16 %v2189
        %v2249 = vunpack.c.h.b16 %v2189
        %v2250 = vunpack.c.l.b16 %v2190
        %v2251 = vpack.c.b16 %v2218, %v2215
        %v2252 = vpack.c.b16 %v2219, %v2216
        %v2253 = vpack.c.b16 %v2220, %v2217
        %v2254 = vpack.c.b16 %v2224, %v2221
        %v2255 = vpack.c.b16 %v2225, %v2222
        %v2256 = vpack.c.b16 %v2226, %v2223
        %v2257 = vpack.c.b16 %v2230, %v2227
        %v2258 = vpack.c.b16 %v2231, %v2228
        %v2259 = vpack.c.b16 %v2232, %v2229
        %v2260 = vpack.c.b16 %v2236, %v2233
        %v2261 = vpack.c.b16 %v2237, %v2234
        %v2262 = vpack.c.b16 %v2238, %v2235
        %v2263 = vpack.c.b16 %v2242, %v2239
        %v2264 = vpack.c.b16 %v2243, %v2240
        %v2265 = vpack.c.b16 %v2244, %v2241
        %v2266 = vpack.c.b16 %v2248, %v2245
        %v2267 = vpack.c.b16 %v2249, %v2246
        %v2268 = vpack.c.b16 %v2250, %v2247
        %2269 = vrot.lane.b32.xlu0 %v2251, 112
        %v2270 = vpop.permute.xlu0 %2269
        %2271 = vrot.lane.b32.xlu0 %v2252, 112
        %v2272 = vpop.permute.xlu0 %2271
        %2273 = vrot.lane.b32.xlu0 %v2253, 112
        %v2274 = vpop.permute.xlu0 %2273
        %2275 = vrot.lane.b32.xlu0 %v2254, 112
        %v2276 = vpop.permute.xlu0 %2275
        %2277 = vrot.lane.b32.xlu0 %v2255, 112
        %v2278 = vpop.permute.xlu0 %2277
        %2279 = vrot.lane.b32.xlu0 %v2256, 112
        %v2280 = vpop.permute.xlu0 %2279
        %2281 = vrot.lane.b32.xlu0 %v2257, 112
        %v2282 = vpop.permute.xlu0 %2281
        %2283 = vrot.lane.b32.xlu0 %v2258, 112
        %v2284 = vpop.permute.xlu0 %2283
        %2285 = vrot.lane.b32.xlu0 %v2259, 112
        %v2286 = vpop.permute.xlu0 %2285
        %2287 = vrot.lane.b32.xlu0 %v2260, 112
        %v2288 = vpop.permute.xlu0 %2287
        %2289 = vrot.lane.b32.xlu0 %v2261, 112
        %v2290 = vpop.permute.xlu0 %2289
        %2291 = vrot.lane.b32.xlu0 %v2262, 112
        %v2292 = vpop.permute.xlu0 %2291
        %2293 = vrot.lane.b32.xlu0 %v2263, 112
        %v2294 = vpop.permute.xlu0 %2293
        %2295 = vrot.lane.b32.xlu0 %v2264, 112
        %v2296 = vpop.permute.xlu0 %2295
        %2297 = vrot.lane.b32.xlu0 %v2265, 112
        %v2298 = vpop.permute.xlu0 %2297
        %2299 = vrot.lane.b32.xlu0 %v2266, 112
        %v2300 = vpop.permute.xlu0 %2299
        %2301 = vrot.lane.b32.xlu0 %v2267, 112
        %v2302 = vpop.permute.xlu0 %2301
        %2303 = vrot.lane.b32.xlu0 %v2268, 112
        %v2304 = vpop.permute.xlu0 %2303
        %v2305 = vsel %vm964, %v2270, %v2272
        %v2306 = vsel %vm964, %v2272, %v2274
        %v2307 = vsel %vm964, %v2276, %v2278
        %v2308 = vsel %vm964, %v2278, %v2280
        %v2309 = vsel %vm964, %v2282, %v2284
        %v2310 = vsel %vm964, %v2284, %v2286
        %v2311 = vsel %vm964, %v2288, %v2290
        %v2312 = vsel %vm964, %v2290, %v2292
        %v2313 = vsel %vm964, %v2294, %v2296
        %v2314 = vsel %vm964, %v2296, %v2298
        %v2315 = vsel %vm964, %v2300, %v2302
        %v2316 = vsel %vm964, %v2302, %v2304
        %v2330 = vsel %vm1276, %v2166, 0
        %2332 = vmatpush.bf16.msra.mxu0 0
        %2333 = vmatpush.bf16.msra.mxu0 0
        %2334 = vmatpush.bf16.msra.mxu0 %v2315
        %2335 = vmatpush.bf16.msra.mxu0 %v2313
        %2336 = vmatpush.bf16.msra.mxu0 %v2311
        %2337 = vmatpush.bf16.msra.mxu0 %v2309
        %2338 = vmatpush.bf16.msra.mxu0 %v2307
        %2339 = vmatpush.bf16.msra.mxu0 %v2305
        %2340 = vmatmul.bf16.gmra.mxu0 %v2330
        %v2341 = vpop.f32.mrf.mxu0
        %v2342 = vadd.f32 0.0, %v2341
        %v2343 = vpop.f32.mrf.mxu0
        %2344 = vdwg.mxu0
        %2345 = vmatpush.bf16.msra.mxu0 0
        %2346 = vmatpush.bf16.msra.mxu0 0
        %2347 = vmatpush.bf16.msra.mxu0 %v2316
        %2348 = vmatpush.bf16.msra.mxu0 %v2314
        %2349 = vmatpush.bf16.msra.mxu0 %v2312
        %2350 = vmatpush.bf16.msra.mxu0 %v2310
        %2351 = vmatpush.bf16.msra.mxu0 %v2308
        %2352 = vmatpush.bf16.msra.mxu0 %v2306
        %2353 = vmatmul.bf16.gmra.mxu0 %v2330
        %v2354 = vpop.f32.mrf.mxu0
        %v2355 = vadd.f32 0.0, %v2354
        %v2356 = vpop.f32.mrf.mxu0
        %2357 = vdwg.mxu0
        %v2358 = vadd.f32 %v2149, %v2342
        %v2359 = vadd.f32 %v2162, %v2355
        %v2360 = vld [vmem:[%s10] sm:$0x7]
        %2362 = vset.pattern.permute.xlu0 0
        %2363 = vperm.xlu0 %2362, %v2360
        %v2364 = vpop.permute.xlu0 %2363
        %v2366 = vadd.f32 %v2358, %v2364
        %v2367 = vadd.f32 %v2359, %v2364
        %v2368 = vtanh.pop %v2366
        %v2369 = vtanh.pop %v2367
        %v2370 = vld [vmem:[%s400] sm:$0x77]
        %v2371 = vstv %s407
        %v2372 = vmul.f32 %v2371, %v2368
        %v2373 = vmul.f32 %v2371, %v2369
        %v2376 = vrot.slane %v2373, 4
        %v2377 = vsel %vm408, %v2372, %v2376
        %v2379 = vadd.f32 %v2370, %v2377
        %v2380 = vmax.f32 %v2379, 0.0
        %v2381 = vmin.f32 %v2380, 1.0
        %2382 = vst [vmem:[%s400] sm:$0x77] %v2381
        %p2383 = scmp.lt.s32.totalorder %s23, 1
        %s2384 = scalar_select %p2383, %s23, 1
        %s2385 = smul.addr %s2384, 2
        %s2386 = smul.addr %s2385, 4
        %s2387 = scalar_lea.vmem %s11, %s2386
        // Predicated region
        $region69: #{tpu_custom_call.1} parent=63 // pred_check
          %p2388 = pneg %p277
        $region70: #{tpu_custom_call.1} parent=63 // pred_check_branch
          %2390 = sbr.rel (%p2388) target = $region72
        $region71: #{tpu_custom_call.1} parent=63 // pred_region
          _
        $region72: #{tpu_custom_call.1} parent=63 // pred_fallthru
          _
      $region64: #{tpu_custom_call.1} parent=5 // pred_fallthru
        _
      %p2391 = scmp.le.s32.totalorder 2, %s18
      // Predicated region
      $region73: #{tpu_custom_call.1} parent=5 // pred_check
        %p2392 = pneg %p2391
      $region74: #{tpu_custom_call.1} parent=5 // pred_check_branch
        %2394 = sbr.rel (%p2392) target = $region76
      $region75: #{tpu_custom_call.1} parent=5 // pred_region
        %s2395 = ssub.s32 %s18, 2
        // Predicated region
        $region77: #{tpu_custom_call.1} parent=75 // pred_check
          %p2396 = pneg %p283
        $region78: #{tpu_custom_call.1} parent=75 // pred_check_branch
          %2398 = sbr.rel (%p2396) target = $region80
        $region79: #{tpu_custom_call.1} parent=75 // pred_region
          %p2399 = scmp.lt.s32.totalorder %s24, 1
          %s2400 = scalar_select %p2399, %s24, 1
          %s2401 = smul.addr %s2400, 2
          %s2402 = smul.addr %s2401, 4
          %s2403 = scalar_lea.vmem %s11, %s2402
        $region80: #{tpu_custom_call.1} parent=75 // pred_fallthru
          _
      $region76: #{tpu_custom_call.1} parent=5 // pred_fallthru
        _
    $region6: #{tpu_custom_call.1} parent=1 // loop_footer
      %s22 = sadd.s32 1, %s18
    $region7: #{tpu_custom_call.1} parent=1 // loop_footer_branch
      %17 = sbr.rel target = $region3
    $region8: #{tpu_custom_call.1} parent=1 // loop_exit
      _
    %2404 = vsyncpa [#allocation5], 1
    %s2405 = scalar_lea.sflag [#allocation5], 1
    %2406 = vsyncpa %s2405, 1

</llo_original>
